<compile_context>
chip_gen: v7x
topology: tpu7x:2x2x1
jax: 0.10.0
libtpu: 0.0.40
codegen_flags: <defaults>
</compile_context>

<pallas_src>
import functools
import math

import jax
import jax.numpy as jnp
from jax.experimental import pallas as pl
from jax.experimental.pallas import tpu as pltpu


# ---------------------------------------------------------------------------
# Tile-size helper
# ---------------------------------------------------------------------------

def _pick_tile(dim, target, align):
    """Largest `align`-multiple divisor of `dim` that is <= target; falls back to
    the full dim (always a legal Pallas block)."""
    if dim <= target:
        return dim
    t = (target // align) * align
    while t >= align:
        if dim % t == 0:
            return t
        t -= align
    return dim


# ---------------------------------------------------------------------------
# Pallas kernels
# ---------------------------------------------------------------------------

def _ln_linear_kernel(x_ref, g_ref, b_ref, w_ref, bias_ref, o_ref, *, activation):
    """out = act( LayerNorm(x) @ W + bias ).  LN stats in fp32, matmul fp32-acc."""
    x = x_ref[...].astype(jnp.float32)                       # (tm, K)
    mean = jnp.mean(x, axis=-1, keepdims=True)
    var = jnp.mean(jnp.square(x - mean), axis=-1, keepdims=True)
    y = (x - mean) * jax.lax.rsqrt(var + 1e-5)
    y = y * g_ref[...].astype(jnp.float32) + b_ref[...].astype(jnp.float32)
    y = y.astype(w_ref.dtype)                                # bf16 into the MXU
    acc = jnp.dot(y, w_ref[...], preferred_element_type=jnp.float32)   # (tm, tn)
    acc = acc + bias_ref[...].astype(jnp.float32)
    if activation == "quickgelu":
        acc = acc * jax.nn.sigmoid(1.702 * acc)
    o_ref[...] = acc.astype(o_ref.dtype)


def _linear_residual_kernel(x_ref, w_ref, bias_ref, r_ref, o_ref, acc_ref):
    """out = x @ W + bias + residual, K-tiled with fp32 VMEM accumulator."""
    @pl.when(pl.program_id(2) == 0)
    def _():
        acc_ref[...] = jnp.zeros_like(acc_ref)

    acc_ref[...] += jnp.dot(x_ref[...], w_ref[...],
                            preferred_element_type=jnp.float32)

    @pl.when(pl.program_id(2) == pl.num_programs(2) - 1)
    def _():
        y = (acc_ref[...]
             + bias_ref[...].astype(jnp.float32)
             + r_ref[...].astype(jnp.float32))
        o_ref[...] = y.astype(o_ref.dtype)


def _attention_kernel(q_ref, k_ref, v_ref, o_ref, *, scale):
    """All heads of one batch per grid step.  q/k/v refs: (H, L, hd)."""
    q = q_ref[...]
    k = k_ref[...]
    v = v_ref[...]
    # scores in fp32, scale applied on the fp32 scores (free VALU work under MXU)
    s = jnp.einsum('hqd,hkd->hqk', q, k,
                   preferred_element_type=jnp.float32) * scale          # (H, L, L)
    s = s - jnp.max(s, axis=-1, keepdims=True)
    p = jnp.exp(s)
    p = p * pl.reciprocal(jnp.sum(p, axis=-1, keepdims=True), approx=True)
    o = jnp.einsum('hqk,hkd->hqd', p.astype(v.dtype), v,
                   preferred_element_type=jnp.float32)                   # (H, L, hd)
    o_ref[...] = o.astype(o_ref.dtype)


# ---------------------------------------------------------------------------
# Pallas wrappers
# ---------------------------------------------------------------------------

_VMEM_LIMIT = 64 * 1024 * 1024  # cap only; chosen tiles use a few MiB at most


def ln_linear(x2d, gamma, beta, w_t, bias, activation=None,
              *, tm_target=256, tn_target=512):
    """act(LayerNorm(x) @ w_t + bias).  w_t is [K, N] (torch weight transposed)."""
    M, K = x2d.shape
    N = w_t.shape[1]
    tm = _pick_tile(M, tm_target, 8)
    tn = _pick_tile(N, tn_target, 128)
    kernel = functools.partial(_ln_linear_kernel, activation=activation)
    return pl.pallas_call(
        kernel,
        out_shape=jax.ShapeDtypeStruct((M, N), x2d.dtype),
        grid=(M // tm, N // tn),
        in_specs=[
            pl.BlockSpec((tm, K), lambda i, j: (i, 0)),
            pl.BlockSpec((1, K), lambda i, j: (0, 0)),
            pl.BlockSpec((1, K), lambda i, j: (0, 0)),
            pl.BlockSpec((K, tn), lambda i, j: (0, j)),
            pl.BlockSpec((1, tn), lambda i, j: (0, j)),
        ],
        out_specs=pl.BlockSpec((tm, tn), lambda i, j: (i, j)),
        compiler_params=pltpu.CompilerParams(
            dimension_semantics=("parallel", "parallel"),
            vmem_limit_bytes=_VMEM_LIMIT,
        ),
    )(x2d, gamma.reshape(1, K), beta.reshape(1, K), w_t, bias.reshape(1, N))


def linear_residual(x2d, w_t, bias, residual,
                    *, tm_target=256, tn_target=512, tk_target=512):
    """x @ w_t + bias + residual, K-tiled with accumulator scratch."""
    M, K = x2d.shape
    N = w_t.shape[1]
    tm = _pick_tile(M, tm_target, 8)
    tn = _pick_tile(N, tn_target, 128)
    tk = _pick_tile(K, tk_target, 128)
    return pl.pallas_call(
        _linear_residual_kernel,
        out_shape=jax.ShapeDtypeStruct((M, N), residual.dtype),
        grid=(M // tm, N // tn, K // tk),
        in_specs=[
            pl.BlockSpec((tm, tk), lambda i, j, k: (i, k)),
            pl.BlockSpec((tk, tn), lambda i, j, k: (k, j)),
            pl.BlockSpec((1, tn), lambda i, j, k: (0, j)),
            pl.BlockSpec((tm, tn), lambda i, j, k: (i, j)),
        ],
        out_specs=pl.BlockSpec((tm, tn), lambda i, j, k: (i, j)),
        scratch_shapes=[pltpu.VMEM((tm, tn), jnp.float32)],
        compiler_params=pltpu.CompilerParams(
            dimension_semantics=("parallel", "parallel", "arbitrary"),
            vmem_limit_bytes=_VMEM_LIMIT,
        ),
    )(x2d, w_t, bias.reshape(1, N), residual)


def sdpa(qh, kh, vh, n_head, scale):
    """qh/kh/vh: [N*H, L, hd] (head-major per batch) -> [N*H, L, hd]."""
    NH, L, hd = qh.shape
    n_batch = NH // n_head
    blk = pl.BlockSpec((n_head, L, hd), lambda b: (b, 0, 0))
    return pl.pallas_call(
        functools.partial(_attention_kernel, scale=scale),
        out_shape=jax.ShapeDtypeStruct((NH, L, hd), qh.dtype),
        grid=(n_batch,),
        in_specs=[blk, blk, blk],
        out_specs=pl.BlockSpec((n_head, L, hd), lambda b: (b, 0, 0)),
        compiler_params=pltpu.CompilerParams(
            dimension_semantics=("parallel",),
            vmem_limit_bytes=_VMEM_LIMIT,
        ),
    )(qh, kh, vh)


# ---------------------------------------------------------------------------
# Transformer forward (glue in plain JAX)
# ---------------------------------------------------------------------------

def residual_attention_block(x2d, p, n_head, seq_len, n_batch):
    """x2d: [N*L, D] (batch-first tokens) -> [N*L, D]."""
    M, D = x2d.shape
    hd = D // n_head
    scale = 1.0 / math.sqrt(hd)

    # ---- x = x + out_proj(attn(ln_1(x))) ----
    qkv = ln_linear(x2d, p["ln1_g"], p["ln1_b"],
                    p["in_proj_w_t"], p["in_proj_b"])                 # [N*L, 3D]

    # TODO(synk): head split/merge below are plain-XLA transposes; a BlockSpec
    # gather over (batch, head) inside sdpa could remove these HBM passes.
    qkv = qkv.reshape(n_batch, seq_len, 3, n_head, hd).transpose(2, 0, 3, 1, 4)
    q = qkv[0].reshape(n_batch * n_head, seq_len, hd)
    k = qkv[1].reshape(n_batch * n_head, seq_len, hd)
    v = qkv[2].reshape(n_batch * n_head, seq_len, hd)

    attn = sdpa(q, k, v, n_head, scale)                               # [N*H, L, hd]
    attn = (attn.reshape(n_batch, n_head, seq_len, hd)
                .transpose(0, 2, 1, 3)
                .reshape(M, D))

    x2d = linear_residual(attn, p["out_proj_w_t"], p["out_proj_b"], x2d)

    # ---- x = x + c_proj(quickgelu(c_fc(ln_2(x)))) ----
    h = ln_linear(x2d, p["ln2_g"], p["ln2_b"],
                  p["c_fc_w_t"], p["c_fc_b"], activation="quickgelu")  # [N*L, 4D]
    x2d = linear_residual(h, p["c_proj_w_t"], p["c_proj_b"], x2d)
    return x2d


def transformer_forward(x, params, n_head):
    """x: [L, N, D] (seq-first, like nn.MultiheadAttention batch_first=False)."""
    L, N, D = x.shape
    orig_dtype = x.dtype
    compute_dtype = params[0]["in_proj_w_t"].dtype
    xb = jnp.transpose(x, (1, 0, 2)).reshape(N * L, D).astype(compute_dtype)
    for p in params:
        xb = residual_attention_block(xb, p, n_head, L, N)
    out = jnp.transpose(xb.reshape(N, L, D), (1, 0, 2)).astype(orig_dtype)
    return out


# ---------------------------------------------------------------------------
# Deterministic parameter init (shapes from the PyTorch module __init__)
# ---------------------------------------------------------------------------

def init_params(key, width, layers, weight_dtype=jnp.bfloat16):
    D = width
    params = []
    for li in range(layers):
        k = jax.random.fold_in(key, li)
        ks = jax.random.split(k, 4)
        p = {
            # ln_1 / ln_2 (kept fp32 — LN math runs in fp32 in-kernel)
            "ln1_g": jnp.ones((D,), jnp.float32),
            "ln1_b": jnp.zeros((D,), jnp.float32),
            "ln2_g": jnp.ones((D,), jnp.float32),
            "ln2_b": jnp.zeros((D,), jnp.float32),
            # MultiheadAttention in_proj ([3D, D] in torch -> stored transposed [D, 3D])
            "in_proj_w_t": (0.02 * jax.random.normal(ks[0], (D, 3 * D),
                                                     jnp.float32)).astype(weight_dtype),
            "in_proj_b": jnp.zeros((3 * D,), jnp.float32),
            # out_proj ([D, D] in torch -> transposed)
            "out_proj_w_t": (0.02 * jax.random.normal(ks[1], (D, D),
                                                      jnp.float32)).astype(weight_dtype),
            "out_proj_b": jnp.zeros((D,), jnp.float32),
            # mlp c_fc ([4D, D] -> transposed), c_proj ([D, 4D] -> transposed)
            "c_fc_w_t": (0.02 * jax.random.normal(ks[2], (D, 4 * D),
                                                  jnp.float32)).astype(weight_dtype),
            "c_fc_b": jnp.zeros((4 * D,), jnp.float32),
            "c_proj_w_t": (0.02 * jax.random.normal(ks[3], (4 * D, D),
                                                    jnp.float32)).astype(weight_dtype),
            "c_proj_b": jnp.zeros((D,), jnp.float32),
        }
        params.append(p)
    return params


# ---------------------------------------------------------------------------
# Main
# ---------------------------------------------------------------------------

if __name__ == "__main__":
    # Small shapes consistent with Transformer(width, layers, heads):
    width, layers, heads = 32, 2, 4
    seq_len, batch = 8, 2

    key = jax.random.PRNGKey(0)
    x = jax.random.normal(jax.random.fold_in(key, 999),
                          (seq_len, batch, width), dtype=jnp.float32)
    params = init_params(key, width, layers)

    fwd = jax.jit(functools.partial(transformer_forward, n_head=heads))
    out = jax.block_until_ready(fwd(x, params))

    assert out.shape == (seq_len, batch, width)
    assert out.dtype == x.dtype
    assert jnp.all(jnp.isfinite(out))
    # TODO(synk): attn_mask is None for this Transformer instantiation; mask support
    # (adding the mask to the scores inside _attention_kernel) is not wired up.
    # TODO(synk): for very long sequences, switch sdpa to a KV-blocked online-softmax
    # (flash) accumulator so the [L, L] score tile stays bounded.
    print("KERNEL_OK")
</pallas_src>

<mosaic_0001>
module attributes {stable_mosaic.version = 11 : i64} {
  func.func @_ln_linear_kernel(%arg0: i32, %arg1: i32, %arg2: memref<16x32xbf16, #tpu.memory_space<vmem>>, %arg3: memref<1x32xf32, #tpu.memory_space<vmem>>, %arg4: memref<1x32xf32, #tpu.memory_space<vmem>>, %arg5: memref<32x96xbf16, #tpu.memory_space<vmem>>, %arg6: memref<1x96xf32, #tpu.memory_space<vmem>>, %arg7: memref<16x96xbf16, #tpu.memory_space<vmem>>) attributes {dimension_semantics = [#tpu.dimension_semantics<parallel>, #tpu.dimension_semantics<parallel>], iteration_bounds = array<i64: 1, 1>, scalar_prefetch = 0 : i64, scratch_operands = 0 : i64, tpu.core_type = #tpu.core_type<tc>, window_params = [{transform_indices = @transform_0, window_bounds = array<i64: 16, 32>}, {pipeline_mode = #tpu.pipeline_mode<synchronous>, transform_indices = @transform_1, window_bounds = array<i64: 1, 32>}, {pipeline_mode = #tpu.pipeline_mode<synchronous>, transform_indices = @transform_2, window_bounds = array<i64: 1, 32>}, {transform_indices = @transform_3, window_bounds = array<i64: 32, 96>}, {transform_indices = @transform_4, window_bounds = array<i64: 1, 96>}, {transform_indices = @transform_5, window_bounds = array<i64: 16, 96>}]} {
    %c0 = arith.constant 0 : index
    %c0_0 = arith.constant 0 : index
    %0 = vector.load %arg2[%c0, %c0_0] : memref<16x32xbf16, #tpu.memory_space<vmem>>, vector<16x32xbf16>
    %1 = arith.extf %0 : vector<16x32xbf16> to vector<16x32xf32>
    %cst = arith.constant dense<0.000000e+00> : vector<16xf32>
    %2 = vector.multi_reduction <add>, %1, %cst [1] : vector<16x32xf32> to vector<16xf32>
    %3 = vector.shape_cast %2 : vector<16xf32> to vector<16x1xf32>
    %cst_1 = arith.constant 3.200000e+01 : f32
    %4 = vector.broadcast %cst_1 : f32 to vector<16x1xf32>
    %5 = arith.divf %3, %4 : vector<16x1xf32>
    %6 = vector.broadcast %5 : vector<16x1xf32> to vector<16x32xf32>
    %7 = arith.subf %1, %6 : vector<16x32xf32>
    %8 = arith.mulf %7, %7 : vector<16x32xf32>
    %cst_2 = arith.constant dense<0.000000e+00> : vector<16xf32>
    %9 = vector.multi_reduction <add>, %8, %cst_2 [1] : vector<16x32xf32> to vector<16xf32>
    %10 = vector.shape_cast %9 : vector<16xf32> to vector<16x1xf32>
    %cst_3 = arith.constant 3.200000e+01 : f32
    %11 = vector.broadcast %cst_3 : f32 to vector<16x1xf32>
    %12 = arith.divf %10, %11 : vector<16x1xf32>
    %13 = vector.broadcast %5 : vector<16x1xf32> to vector<16x32xf32>
    %14 = arith.subf %1, %13 : vector<16x32xf32>
    %cst_4 = arith.constant 9.99999974E-6 : f32
    %15 = vector.broadcast %cst_4 : f32 to vector<16x1xf32>
    %16 = arith.addf %12, %15 : vector<16x1xf32>
    %17 = math.rsqrt %16 : vector<16x1xf32>
    %18 = vector.broadcast %17 : vector<16x1xf32> to vector<16x32xf32>
    %19 = arith.mulf %14, %18 : vector<16x32xf32>
    %c0_5 = arith.constant 0 : index
    %c0_6 = arith.constant 0 : index
    %20 = vector.load %arg3[%c0_5, %c0_6] : memref<1x32xf32, #tpu.memory_space<vmem>>, vector<1x32xf32>
    %21 = vector.broadcast %20 : vector<1x32xf32> to vector<16x32xf32>
    %22 = arith.mulf %19, %21 : vector<16x32xf32>
    %c0_7 = arith.constant 0 : index
    %c0_8 = arith.constant 0 : index
    %23 = vector.load %arg4[%c0_7, %c0_8] : memref<1x32xf32, #tpu.memory_space<vmem>>, vector<1x32xf32>
    %24 = vector.broadcast %23 : vector<1x32xf32> to vector<16x32xf32>
    %25 = arith.addf %22, %24 : vector<16x32xf32>
    %26 = arith.truncf %25 : vector<16x32xf32> to vector<16x32xbf16>
    %c0_9 = arith.constant 0 : index
    %c0_10 = arith.constant 0 : index
    %27 = vector.load %arg5[%c0_9, %c0_10] : memref<32x96xbf16, #tpu.memory_space<vmem>>, vector<32x96xbf16>
    %cst_11 = arith.constant dense<0.000000e+00> : vector<16x96xf32>
    %28 = tpu.matmul %26, %27, %cst_11 {dimension_numbers = #tpu.dot_dimension_numbers<[1], [0], [0], [1], [0, 0, 1, 1], [], []>} : vector<16x32xbf16>, vector<32x96xbf16>, vector<16x96xf32> -> vector<16x96xf32>
    %c0_12 = arith.constant 0 : index
    %c0_13 = arith.constant 0 : index
    %29 = vector.load %arg6[%c0_12, %c0_13] : memref<1x96xf32, #tpu.memory_space<vmem>>, vector<1x96xf32>
    %30 = vector.broadcast %29 : vector<1x96xf32> to vector<16x96xf32>
    %31 = arith.addf %28, %30 : vector<16x96xf32>
    %32 = arith.truncf %31 : vector<16x96xf32> to vector<16x96xbf16>
    %c0_14 = arith.constant 0 : index
    %c0_15 = arith.constant 0 : index
    %33 = vector.load %arg7[%c0_14, %c0_15] : memref<16x96xbf16, #tpu.memory_space<vmem>>, vector<16x96xbf16>
    tpu.vector_store %arg7[%c0_14, %c0_15], %32 {strides = array<i32>} : memref<16x96xbf16, #tpu.memory_space<vmem>>, vector<16x96xbf16>,
    return
  }
  func.func @transform_0(%arg0: i32, %arg1: i32) -> (i32, i32) {
    %c0_i32 = arith.constant 0 : i32
    %c0_i32_0 = arith.constant 0 : i32
    return %arg0, %c0_i32 : i32, i32
  }
  func.func @transform_1(%arg0: i32, %arg1: i32) -> (i32, i32) {
    %c0_i32 = arith.constant 0 : i32
    %c0_i32_0 = arith.constant 0 : i32
    %c0_i32_1 = arith.constant 0 : i32
    return %c0_i32, %c0_i32_0 : i32, i32
  }
  func.func @transform_2(%arg0: i32, %arg1: i32) -> (i32, i32) {
    %c0_i32 = arith.constant 0 : i32
    %c0_i32_0 = arith.constant 0 : i32
    %c0_i32_1 = arith.constant 0 : i32
    return %c0_i32, %c0_i32_0 : i32, i32
  }
  func.func @transform_3(%arg0: i32, %arg1: i32) -> (i32, i32) {
    %c0_i32 = arith.constant 0 : i32
    %c0_i32_0 = arith.constant 0 : i32
    return %c0_i32, %arg1 : i32, i32
  }
  func.func @transform_4(%arg0: i32, %arg1: i32) -> (i32, i32) {
    %c0_i32 = arith.constant 0 : i32
    %c0_i32_0 = arith.constant 0 : i32
    return %c0_i32, %arg1 : i32, i32
  }
  func.func @transform_5(%arg0: i32, %arg1: i32) -> (i32, i32) {
    %c0_i32 = arith.constant 0 : i32
    return %arg0, %arg1 : i32, i32
  }
}

module attributes {stable_mosaic.version = 11 : i64} {
  func.func @_attention_kernel(%arg0: i32, %arg1: memref<4x8x8xbf16, #tpu.memory_space<vmem>>, %arg2: memref<4x8x8xbf16, #tpu.memory_space<vmem>>, %arg3: memref<4x8x8xbf16, #tpu.memory_space<vmem>>, %arg4: memref<4x8x8xbf16, #tpu.memory_space<vmem>>) attributes {dimension_semantics = [#tpu.dimension_semantics<parallel>], iteration_bounds = array<i64: 2>, scalar_prefetch = 0 : i64, scratch_operands = 0 : i64, tpu.core_type = #tpu.core_type<tc>, window_params = [{transform_indices = @transform_0, window_bounds = array<i64: 4, 8, 8>}, {transform_indices = @transform_1, window_bounds = array<i64: 4, 8, 8>}, {transform_indices = @transform_2, window_bounds = array<i64: 4, 8, 8>}, {transform_indices = @transform_3, window_bounds = array<i64: 4, 8, 8>}]} {
    %c0 = arith.constant 0 : index
    %c0_0 = arith.constant 0 : index
    %c0_1 = arith.constant 0 : index
    %0 = vector.load %arg1[%c0, %c0_0, %c0_1] : memref<4x8x8xbf16, #tpu.memory_space<vmem>>, vector<4x8x8xbf16>
    %c0_2 = arith.constant 0 : index
    %c0_3 = arith.constant 0 : index
    %c0_4 = arith.constant 0 : index
    %1 = vector.load %arg2[%c0_2, %c0_3, %c0_4] : memref<4x8x8xbf16, #tpu.memory_space<vmem>>, vector<4x8x8xbf16>
    %c0_5 = arith.constant 0 : index
    %c0_6 = arith.constant 0 : index
    %c0_7 = arith.constant 0 : index
    %2 = vector.load %arg3[%c0_5, %c0_6, %c0_7] : memref<4x8x8xbf16, #tpu.memory_space<vmem>>, vector<4x8x8xbf16>
    "tpu.trace_start"() <{level = 10 : i32, message = "hqd,hkd->hqk"}> : () -> ()
    %cst = arith.constant dense<0.000000e+00> : vector<4x8x8xf32>
    %3 = tpu.matmul %0, %1, %cst {dimension_numbers = #tpu.dot_dimension_numbers<[2], [2], [1], [1], [0, 0, 0, 1, 1, 1], [0], [0]>} : vector<4x8x8xbf16>, vector<4x8x8xbf16>, vector<4x8x8xf32> -> vector<4x8x8xf32>
    "tpu.trace_stop"() : () -> ()
    %cst_8 = arith.constant 0.353553385 : f32
    %4 = vector.broadcast %cst_8 : f32 to vector<4x8x8xf32>
    %5 = arith.mulf %3, %4 : vector<4x8x8xf32>
    %cst_9 = arith.constant dense<0xFF800000> : vector<4x8xf32>
    %6 = vector.multi_reduction <maximumf>, %5, %cst_9 [2] : vector<4x8x8xf32> to vector<4x8xf32>
    %7 = vector.shape_cast %6 : vector<4x8xf32> to vector<4x8x1xf32>
    %8 = vector.broadcast %7 : vector<4x8x1xf32> to vector<4x8x8xf32>
    %9 = arith.subf %5, %8 : vector<4x8x8xf32>
    %10 = math.exp %9 : vector<4x8x8xf32>
    %cst_10 = arith.constant dense<0.000000e+00> : vector<4x8xf32>
    %11 = vector.multi_reduction <add>, %10, %cst_10 [2] : vector<4x8x8xf32> to vector<4x8xf32>
    %12 = vector.shape_cast %11 : vector<4x8xf32> to vector<4x8x1xf32>
    %13 = tpu.reciprocal %12 {approx = true} : vector<4x8x1xf32> -> vector<4x8x1xf32>
    %14 = vector.broadcast %13 : vector<4x8x1xf32> to vector<4x8x8xf32>
    %15 = arith.mulf %10, %14 : vector<4x8x8xf32>
    %16 = arith.truncf %15 : vector<4x8x8xf32> to vector<4x8x8xbf16>
    "tpu.trace_start"() <{level = 10 : i32, message = "hqk,hkd->hqd"}> : () -> ()
    %cst_11 = arith.constant dense<0.000000e+00> : vector<4x8x8xf32>
    %17 = tpu.matmul %16, %2, %cst_11 {dimension_numbers = #tpu.dot_dimension_numbers<[2], [1], [1], [2], [0, 0, 0, 1, 1, 2], [0], [0]>} : vector<4x8x8xbf16>, vector<4x8x8xbf16>, vector<4x8x8xf32> -> vector<4x8x8xf32>
    "tpu.trace_stop"() : () -> ()
    %18 = arith.truncf %17 : vector<4x8x8xf32> to vector<4x8x8xbf16>
    %c0_12 = arith.constant 0 : index
    %c0_13 = arith.constant 0 : index
    %c0_14 = arith.constant 0 : index
    %19 = vector.load %arg4[%c0_12, %c0_13, %c0_14] : memref<4x8x8xbf16, #tpu.memory_space<vmem>>, vector<4x8x8xbf16>
    tpu.vector_store %arg4[%c0_12, %c0_13, %c0_14], %18 {strides = array<i32>} : memref<4x8x8xbf16, #tpu.memory_space<vmem>>, vector<4x8x8xbf16>,
    return
  }
  func.func @transform_0(%arg0: i32) -> (i32, i32, i32) {
    %c0_i32 = arith.constant 0 : i32
    %c0_i32_0 = arith.constant 0 : i32
    %c0_i32_1 = arith.constant 0 : i32
    return %arg0, %c0_i32, %c0_i32_0 : i32, i32, i32
  }
  func.func @transform_1(%arg0: i32) -> (i32, i32, i32) {
    %c0_i32 = arith.constant 0 : i32
    %c0_i32_0 = arith.constant 0 : i32
    %c0_i32_1 = arith.constant 0 : i32
    return %arg0, %c0_i32, %c0_i32_0 : i32, i32, i32
  }
  func.func @transform_2(%arg0: i32) -> (i32, i32, i32) {
    %c0_i32 = arith.constant 0 : i32
    %c0_i32_0 = arith.constant 0 : i32
    %c0_i32_1 = arith.constant 0 : i32
    return %arg0, %c0_i32, %c0_i32_0 : i32, i32, i32
  }
  func.func @transform_3(%arg0: i32) -> (i32, i32, i32) {
    %c0_i32 = arith.constant 0 : i32
    %c0_i32_0 = arith.constant 0 : i32
    %c0_i32_1 = arith.constant 0 : i32
    return %arg0, %c0_i32, %c0_i32_0 : i32, i32, i32
  }
}

module attributes {stable_mosaic.version = 11 : i64} {
  func.func @_ln_linear_kernel(%arg0: i32, %arg1: i32, %arg2: memref<16x32xbf16, #tpu.memory_space<vmem>>, %arg3: memref<1x32xf32, #tpu.memory_space<vmem>>, %arg4: memref<1x32xf32, #tpu.memory_space<vmem>>, %arg5: memref<32x128xbf16, #tpu.memory_space<vmem>>, %arg6: memref<1x128xf32, #tpu.memory_space<vmem>>, %arg7: memref<16x128xbf16, #tpu.memory_space<vmem>>) attributes {dimension_semantics = [#tpu.dimension_semantics<parallel>, #tpu.dimension_semantics<parallel>], iteration_bounds = array<i64: 1, 1>, scalar_prefetch = 0 : i64, scratch_operands = 0 : i64, tpu.core_type = #tpu.core_type<tc>, window_params = [{transform_indices = @transform_0, window_bounds = array<i64: 16, 32>}, {pipeline_mode = #tpu.pipeline_mode<synchronous>, transform_indices = @transform_1, window_bounds = array<i64: 1, 32>}, {pipeline_mode = #tpu.pipeline_mode<synchronous>, transform_indices = @transform_2, window_bounds = array<i64: 1, 32>}, {transform_indices = @transform_3, window_bounds = array<i64: 32, 128>}, {transform_indices = @transform_4, window_bounds = array<i64: 1, 128>}, {transform_indices = @transform_5, window_bounds = array<i64: 16, 128>}]} {
    %c0 = arith.constant 0 : index
    %c0_0 = arith.constant 0 : index
    %0 = vector.load %arg2[%c0, %c0_0] : memref<16x32xbf16, #tpu.memory_space<vmem>>, vector<16x32xbf16>
    %1 = arith.extf %0 : vector<16x32xbf16> to vector<16x32xf32>
    %cst = arith.constant dense<0.000000e+00> : vector<16xf32>
    %2 = vector.multi_reduction <add>, %1, %cst [1] : vector<16x32xf32> to vector<16xf32>
    %3 = vector.shape_cast %2 : vector<16xf32> to vector<16x1xf32>
    %cst_1 = arith.constant 3.200000e+01 : f32
    %4 = vector.broadcast %cst_1 : f32 to vector<16x1xf32>
    %5 = arith.divf %3, %4 : vector<16x1xf32>
    %6 = vector.broadcast %5 : vector<16x1xf32> to vector<16x32xf32>
    %7 = arith.subf %1, %6 : vector<16x32xf32>
    %8 = arith.mulf %7, %7 : vector<16x32xf32>
    %cst_2 = arith.constant dense<0.000000e+00> : vector<16xf32>
    %9 = vector.multi_reduction <add>, %8, %cst_2 [1] : vector<16x32xf32> to vector<16xf32>
    %10 = vector.shape_cast %9 : vector<16xf32> to vector<16x1xf32>
    %cst_3 = arith.constant 3.200000e+01 : f32
    %11 = vector.broadcast %cst_3 : f32 to vector<16x1xf32>
    %12 = arith.divf %10, %11 : vector<16x1xf32>
    %13 = vector.broadcast %5 : vector<16x1xf32> to vector<16x32xf32>
    %14 = arith.subf %1, %13 : vector<16x32xf32>
    %cst_4 = arith.constant 9.99999974E-6 : f32
    %15 = vector.broadcast %cst_4 : f32 to vector<16x1xf32>
    %16 = arith.addf %12, %15 : vector<16x1xf32>
    %17 = math.rsqrt %16 : vector<16x1xf32>
    %18 = vector.broadcast %17 : vector<16x1xf32> to vector<16x32xf32>
    %19 = arith.mulf %14, %18 : vector<16x32xf32>
    %c0_5 = arith.constant 0 : index
    %c0_6 = arith.constant 0 : index
    %20 = vector.load %arg3[%c0_5, %c0_6] : memref<1x32xf32, #tpu.memory_space<vmem>>, vector<1x32xf32>
    %21 = vector.broadcast %20 : vector<1x32xf32> to vector<16x32xf32>
    %22 = arith.mulf %19, %21 : vector<16x32xf32>
    %c0_7 = arith.constant 0 : index
    %c0_8 = arith.constant 0 : index
    %23 = vector.load %arg4[%c0_7, %c0_8] : memref<1x32xf32, #tpu.memory_space<vmem>>, vector<1x32xf32>
    %24 = vector.broadcast %23 : vector<1x32xf32> to vector<16x32xf32>
    %25 = arith.addf %22, %24 : vector<16x32xf32>
    %26 = arith.truncf %25 : vector<16x32xf32> to vector<16x32xbf16>
    %c0_9 = arith.constant 0 : index
    %c0_10 = arith.constant 0 : index
    %27 = vector.load %arg5[%c0_9, %c0_10] : memref<32x128xbf16, #tpu.memory_space<vmem>>, vector<32x128xbf16>
    %cst_11 = arith.constant dense<0.000000e+00> : vector<16x128xf32>
    %28 = tpu.matmul %26, %27, %cst_11 {dimension_numbers = #tpu.dot_dimension_numbers<[1], [0], [0], [1], [0, 0, 1, 1], [], []>} : vector<16x32xbf16>, vector<32x128xbf16>, vector<16x128xf32> -> vector<16x128xf32>
    %c0_12 = arith.constant 0 : index
    %c0_13 = arith.constant 0 : index
    %29 = vector.load %arg6[%c0_12, %c0_13] : memref<1x128xf32, #tpu.memory_space<vmem>>, vector<1x128xf32>
    %30 = vector.broadcast %29 : vector<1x128xf32> to vector<16x128xf32>
    %31 = arith.addf %28, %30 : vector<16x128xf32>
    %cst_14 = arith.constant 1.702000e+00 : f32
    %32 = vector.broadcast %cst_14 : f32 to vector<16x128xf32>
    %33 = arith.mulf %32, %31 : vector<16x128xf32>
    %34 = arith.negf %33 : vector<16x128xf32>
    %35 = math.exp %34 : vector<16x128xf32>
    %cst_15 = arith.constant 1.000000e+00 : f32
    %36 = vector.broadcast %cst_15 : f32 to vector<16x128xf32>
    %37 = arith.addf %36, %35 : vector<16x128xf32>
    %38 = arith.divf %36, %37 : vector<16x128xf32>
    %39 = arith.mulf %31, %38 : vector<16x128xf32>
    %40 = arith.truncf %39 : vector<16x128xf32> to vector<16x128xbf16>
    %c0_16 = arith.constant 0 : index
    %c0_17 = arith.constant 0 : index
    %41 = vector.load %arg7[%c0_16, %c0_17] : memref<16x128xbf16, #tpu.memory_space<vmem>>, vector<16x128xbf16>
    tpu.vector_store %arg7[%c0_16, %c0_17], %40 {strides = array<i32>} : memref<16x128xbf16, #tpu.memory_space<vmem>>, vector<16x128xbf16>,
    return
  }
  func.func @transform_0(%arg0: i32, %arg1: i32) -> (i32, i32) {
    %c0_i32 = arith.constant 0 : i32
    %c0_i32_0 = arith.constant 0 : i32
    return %arg0, %c0_i32 : i32, i32
  }
  func.func @transform_1(%arg0: i32, %arg1: i32) -> (i32, i32) {
    %c0_i32 = arith.constant 0 : i32
    %c0_i32_0 = arith.constant 0 : i32
    %c0_i32_1 = arith.constant 0 : i32
    return %c0_i32, %c0_i32_0 : i32, i32
  }
  func.func @transform_2(%arg0: i32, %arg1: i32) -> (i32, i32) {
    %c0_i32 = arith.constant 0 : i32
    %c0_i32_0 = arith.constant 0 : i32
    %c0_i32_1 = arith.constant 0 : i32
    return %c0_i32, %c0_i32_0 : i32, i32
  }
  func.func @transform_3(%arg0: i32, %arg1: i32) -> (i32, i32) {
    %c0_i32 = arith.constant 0 : i32
    %c0_i32_0 = arith.constant 0 : i32
    return %c0_i32, %arg1 : i32, i32
  }
  func.func @transform_4(%arg0: i32, %arg1: i32) -> (i32, i32) {
    %c0_i32 = arith.constant 0 : i32
    %c0_i32_0 = arith.constant 0 : i32
    return %c0_i32, %arg1 : i32, i32
  }
  func.func @transform_5(%arg0: i32, %arg1: i32) -> (i32, i32) {
    %c0_i32 = arith.constant 0 : i32
    return %arg0, %arg1 : i32, i32
  }
}

module attributes {stable_mosaic.version = 11 : i64} {
  func.func @_linear_residual_kernel(%arg0: i32, %arg1: i32, %arg2: i32, %arg3: memref<16x32xbf16, #tpu.memory_space<vmem>>, %arg4: memref<32x32xbf16, #tpu.memory_space<vmem>>, %arg5: memref<1x32xf32, #tpu.memory_space<vmem>>, %arg6: memref<16x32xbf16, #tpu.memory_space<vmem>>, %arg7: memref<16x32xbf16, #tpu.memory_space<vmem>>, %arg8: memref<16x32xf32, #tpu.memory_space<vmem>>) attributes {dimension_semantics = [#tpu.dimension_semantics<parallel>, #tpu.dimension_semantics<parallel>, #tpu.dimension_semantics<arbitrary>], iteration_bounds = array<i64: 1, 1, 1>, scalar_prefetch = 0 : i64, scratch_operands = 1 : i64, tpu.core_type = #tpu.core_type<tc>, window_params = [{transform_indices = @transform_0, window_bounds = array<i64: 16, 32>}, {transform_indices = @transform_1, window_bounds = array<i64: 32, 32>}, {transform_indices = @transform_2, window_bounds = array<i64: 1, 32>}, {transform_indices = @transform_3, window_bounds = array<i64: 16, 32>}, {transform_indices = @transform_4, window_bounds = array<i64: 16, 32>}]} {
    %c0_i32 = arith.constant 0 : i32
    %0 = arith.cmpi eq, %arg2, %c0_i32 : i32
    %1 = arith.extui %0 : i1 to i32
    %c0_i32_0 = arith.constant 0 : i32
    %2 = arith.cmpi ne, %1, %c0_i32_0 : i32
    scf.if %2 {
      %cst_10 = arith.constant 0.000000e+00 : f32
      %12 = vector.broadcast %cst_10 : f32 to vector<16x32xf32>
      %c0_11 = arith.constant 0 : index
      %c0_12 = arith.constant 0 : index
      %13 = vector.load %arg8[%c0_11, %c0_12] : memref<16x32xf32, #tpu.memory_space<vmem>>, vector<16x32xf32>
      tpu.vector_store %arg8[%c0_11, %c0_12], %12 {strides = array<i32>} : memref<16x32xf32, #tpu.memory_space<vmem>>, vector<16x32xf32>,
    } else {
    }
    %c0 = arith.constant 0 : index
    %c0_1 = arith.constant 0 : index
    %3 = vector.load %arg8[%c0, %c0_1] : memref<16x32xf32, #tpu.memory_space<vmem>>, vector<16x32xf32>
    %c0_2 = arith.constant 0 : index
    %c0_3 = arith.constant 0 : index
    %4 = vector.load %arg3[%c0_2, %c0_3] : memref<16x32xbf16, #tpu.memory_space<vmem>>, vector<16x32xbf16>
    %c0_4 = arith.constant 0 : index
    %c0_5 = arith.constant 0 : index
    %5 = vector.load %arg4[%c0_4, %c0_5] : memref<32x32xbf16, #tpu.memory_space<vmem>>, vector<32x32xbf16>
    %cst = arith.constant dense<0.000000e+00> : vector<16x32xf32>
    %6 = tpu.matmul %4, %5, %cst {dimension_numbers = #tpu.dot_dimension_numbers<[1], [0], [0], [1], [0, 0, 1, 1], [], []>} : vector<16x32xbf16>, vector<32x32xbf16>, vector<16x32xf32> -> vector<16x32xf32>
    %7 = arith.addf %3, %6 : vector<16x32xf32>
    %c0_6 = arith.constant 0 : index
    %c0_7 = arith.constant 0 : index
    %8 = vector.load %arg8[%c0_6, %c0_7] : memref<16x32xf32, #tpu.memory_space<vmem>>, vector<16x32xf32>
    tpu.vector_store %arg8[%c0_6, %c0_7], %7 {strides = array<i32>} : memref<16x32xf32, #tpu.memory_space<vmem>>, vector<16x32xf32>,
    %c0_i32_8 = arith.constant 0 : i32
    %9 = arith.cmpi eq, %arg2, %c0_i32_8 : i32
    %10 = arith.extui %9 : i1 to i32
    %c0_i32_9 = arith.constant 0 : i32
    %11 = arith.cmpi ne, %10, %c0_i32_9 : i32
    scf.if %11 {
      %c0_10 = arith.constant 0 : index
      %c0_11 = arith.constant 0 : index
      %12 = vector.load %arg8[%c0_10, %c0_11] : memref<16x32xf32, #tpu.memory_space<vmem>>, vector<16x32xf32>
      %c0_12 = arith.constant 0 : index
      %c0_13 = arith.constant 0 : index
      %13 = vector.load %arg5[%c0_12, %c0_13] : memref<1x32xf32, #tpu.memory_space<vmem>>, vector<1x32xf32>
      %14 = vector.broadcast %13 : vector<1x32xf32> to vector<16x32xf32>
      %15 = arith.addf %12, %14 : vector<16x32xf32>
      %c0_14 = arith.constant 0 : index
      %c0_15 = arith.constant 0 : index
      %16 = vector.load %arg6[%c0_14, %c0_15] : memref<16x32xbf16, #tpu.memory_space<vmem>>, vector<16x32xbf16>
      %17 = arith.extf %16 : vector<16x32xbf16> to vector<16x32xf32>
      %18 = arith.addf %15, %17 : vector<16x32xf32>
      %19 = arith.truncf %18 : vector<16x32xf32> to vector<16x32xbf16>
      %c0_16 = arith.constant 0 : index
      %c0_17 = arith.constant 0 : index
      %20 = vector.load %arg7[%c0_16, %c0_17] : memref<16x32xbf16, #tpu.memory_space<vmem>>, vector<16x32xbf16>
      tpu.vector_store %arg7[%c0_16, %c0_17], %19 {strides = array<i32>} : memref<16x32xbf16, #tpu.memory_space<vmem>>, vector<16x32xbf16>,
    } else {
    }
    return
  }
  func.func @transform_0(%arg0: i32, %arg1: i32, %arg2: i32) -> (i32, i32) {
    %c0_i32 = arith.constant 0 : i32
    return %arg0, %arg2 : i32, i32
  }
  func.func @transform_1(%arg0: i32, %arg1: i32, %arg2: i32) -> (i32, i32) {
    %c0_i32 = arith.constant 0 : i32
    return %arg2, %arg1 : i32, i32
  }
  func.func @transform_2(%arg0: i32, %arg1: i32, %arg2: i32) -> (i32, i32) {
    %c0_i32 = arith.constant 0 : i32
    %c0_i32_0 = arith.constant 0 : i32
    return %c0_i32, %arg1 : i32, i32
  }
  func.func @transform_3(%arg0: i32, %arg1: i32, %arg2: i32) -> (i32, i32) {
    %c0_i32 = arith.constant 0 : i32
    return %arg0, %arg1 : i32, i32
  }
  func.func @transform_4(%arg0: i32, %arg1: i32, %arg2: i32) -> (i32, i32) {
    %c0_i32 = arith.constant 0 : i32
    return %arg0, %arg1 : i32, i32
  }
}

module attributes {stable_mosaic.version = 11 : i64} {
  func.func @_linear_residual_kernel(%arg0: i32, %arg1: i32, %arg2: i32, %arg3: memref<16x128xbf16, #tpu.memory_space<vmem>>, %arg4: memref<128x32xbf16, #tpu.memory_space<vmem>>, %arg5: memref<1x32xf32, #tpu.memory_space<vmem>>, %arg6: memref<16x32xbf16, #tpu.memory_space<vmem>>, %arg7: memref<16x32xbf16, #tpu.memory_space<vmem>>, %arg8: memref<16x32xf32, #tpu.memory_space<vmem>>) attributes {dimension_semantics = [#tpu.dimension_semantics<parallel>, #tpu.dimension_semantics<parallel>, #tpu.dimension_semantics<arbitrary>], iteration_bounds = array<i64: 1, 1, 1>, scalar_prefetch = 0 : i64, scratch_operands = 1 : i64, tpu.core_type = #tpu.core_type<tc>, window_params = [{transform_indices = @transform_0, window_bounds = array<i64: 16, 128>}, {transform_indices = @transform_1, window_bounds = array<i64: 128, 32>}, {transform_indices = @transform_2, window_bounds = array<i64: 1, 32>}, {transform_indices = @transform_3, window_bounds = array<i64: 16, 32>}, {transform_indices = @transform_4, window_bounds = array<i64: 16, 32>}]} {
    %c0_i32 = arith.constant 0 : i32
    %0 = arith.cmpi eq, %arg2, %c0_i32 : i32
    %1 = arith.extui %0 : i1 to i32
    %c0_i32_0 = arith.constant 0 : i32
    %2 = arith.cmpi ne, %1, %c0_i32_0 : i32
    scf.if %2 {
      %cst_10 = arith.constant 0.000000e+00 : f32
      %12 = vector.broadcast %cst_10 : f32 to vector<16x32xf32>
      %c0_11 = arith.constant 0 : index
      %c0_12 = arith.constant 0 : index
      %13 = vector.load %arg8[%c0_11, %c0_12] : memref<16x32xf32, #tpu.memory_space<vmem>>, vector<16x32xf32>
      tpu.vector_store %arg8[%c0_11, %c0_12], %12 {strides = array<i32>} : memref<16x32xf32, #tpu.memory_space<vmem>>, vector<16x32xf32>,
    } else {
    }
    %c0 = arith.constant 0 : index
    %c0_1 = arith.constant 0 : index
    %3 = vector.load %arg8[%c0, %c0_1] : memref<16x32xf32, #tpu.memory_space<vmem>>, vector<16x32xf32>
    %c0_2 = arith.constant 0 : index
    %c0_3 = arith.constant 0 : index
    %4 = vector.load %arg3[%c0_2, %c0_3] : memref<16x128xbf16, #tpu.memory_space<vmem>>, vector<16x128xbf16>
    %c0_4 = arith.constant 0 : index
    %c0_5 = arith.constant 0 : index
    %5 = vector.load %arg4[%c0_4, %c0_5] : memref<128x32xbf16, #tpu.memory_space<vmem>>, vector<128x32xbf16>
    %cst = arith.constant dense<0.000000e+00> : vector<16x32xf32>
    %6 = tpu.matmul %4, %5, %cst {dimension_numbers = #tpu.dot_dimension_numbers<[1], [0], [0], [1], [0, 0, 1, 1], [], []>} : vector<16x128xbf16>, vector<128x32xbf16>, vector<16x32xf32> -> vector<16x32xf32>
    %7 = arith.addf %3, %6 : vector<16x32xf32>
    %c0_6 = arith.constant 0 : index
    %c0_7 = arith.constant 0 : index
    %8 = vector.load %arg8[%c0_6, %c0_7] : memref<16x32xf32, #tpu.memory_space<vmem>>, vector<16x32xf32>
    tpu.vector_store %arg8[%c0_6, %c0_7], %7 {strides = array<i32>} : memref<16x32xf32, #tpu.memory_space<vmem>>, vector<16x32xf32>,
    %c0_i32_8 = arith.constant 0 : i32
    %9 = arith.cmpi eq, %arg2, %c0_i32_8 : i32
    %10 = arith.extui %9 : i1 to i32
    %c0_i32_9 = arith.constant 0 : i32
    %11 = arith.cmpi ne, %10, %c0_i32_9 : i32
    scf.if %11 {
      %c0_10 = arith.constant 0 : index
      %c0_11 = arith.constant 0 : index
      %12 = vector.load %arg8[%c0_10, %c0_11] : memref<16x32xf32, #tpu.memory_space<vmem>>, vector<16x32xf32>
      %c0_12 = arith.constant 0 : index
      %c0_13 = arith.constant 0 : index
      %13 = vector.load %arg5[%c0_12, %c0_13] : memref<1x32xf32, #tpu.memory_space<vmem>>, vector<1x32xf32>
      %14 = vector.broadcast %13 : vector<1x32xf32> to vector<16x32xf32>
      %15 = arith.addf %12, %14 : vector<16x32xf32>
      %c0_14 = arith.constant 0 : index
      %c0_15 = arith.constant 0 : index
      %16 = vector.load %arg6[%c0_14, %c0_15] : memref<16x32xbf16, #tpu.memory_space<vmem>>, vector<16x32xbf16>
      %17 = arith.extf %16 : vector<16x32xbf16> to vector<16x32xf32>
      %18 = arith.addf %15, %17 : vector<16x32xf32>
      %19 = arith.truncf %18 : vector<16x32xf32> to vector<16x32xbf16>
      %c0_16 = arith.constant 0 : index
      %c0_17 = arith.constant 0 : index
      %20 = vector.load %arg7[%c0_16, %c0_17] : memref<16x32xbf16, #tpu.memory_space<vmem>>, vector<16x32xbf16>
      tpu.vector_store %arg7[%c0_16, %c0_17], %19 {strides = array<i32>} : memref<16x32xbf16, #tpu.memory_space<vmem>>, vector<16x32xbf16>,
    } else {
    }
    return
  }
  func.func @transform_0(%arg0: i32, %arg1: i32, %arg2: i32) -> (i32, i32) {
    %c0_i32 = arith.constant 0 : i32
    return %arg0, %arg2 : i32, i32
  }
  func.func @transform_1(%arg0: i32, %arg1: i32, %arg2: i32) -> (i32, i32) {
    %c0_i32 = arith.constant 0 : i32
    return %arg2, %arg1 : i32, i32
  }
  func.func @transform_2(%arg0: i32, %arg1: i32, %arg2: i32) -> (i32, i32) {
    %c0_i32 = arith.constant 0 : i32
    %c0_i32_0 = arith.constant 0 : i32
    return %c0_i32, %arg1 : i32, i32
  }
  func.func @transform_3(%arg0: i32, %arg1: i32, %arg2: i32) -> (i32, i32) {
    %c0_i32 = arith.constant 0 : i32
    return %arg0, %arg1 : i32, i32
  }
  func.func @transform_4(%arg0: i32, %arg1: i32, %arg2: i32) -> (i32, i32) {
    %c0_i32 = arith.constant 0 : i32
    return %arg0, %arg1 : i32, i32
  }
}

</mosaic_0001>

<llo_original>
// kernel: transformer_forward.10
$region0: #{transformer_forward.10}
  #allocation0 [shape = 'u32[]', space=smem, size = 0x4, offset = 0x4, fixed_abs, tag = 'smem constant byte address 0x4 - core index']
  #allocation1 [shape = 'u32[144,128]{1,0:T(1,128)}', space=vmem, size = 0x12000, scoped, tag = 'internal scratch']
  %s0 = inlined_call_operand.hbm [shape: bf16[16,32], index: 0, kind: input, shape index: {}]
  %s1 = inlined_call_operand.hbm [shape: f32[1,32], index: 1, kind: input, shape index: {}]
  %s2 = inlined_call_operand.hbm [shape: f32[1,32], index: 2, kind: input, shape index: {}]
  %s3 = inlined_call_operand.hbm [shape: bf16[32,96], index: 3, kind: input, shape index: {}]
  %s4 = inlined_call_operand.hbm [shape: f32[1,96], index: 4, kind: input, shape index: {}]
  %s5 = inlined_call_operand.hbm [shape: bf16[16,96], index: 5, kind: output, shape index: {}]
  %s6 = sld [smem:[#allocation0]]
  $region50: #{transformer_forward.10} parent=0
    _
  %s8 = ssub.s32 1, %s6
  %s9 = scalar_select 0, %s8, %s6
  $region1: #{transformer_forward.10} parent=0
    #allocation2 [shape = 'u8[4096]{0}', space=vmem, size = 0x1000, scoped, tag = 'input window, operand 0, single buffered']
    #allocation3 [shape = 's32[1]{0}', space=sflag, size = 0x4, scoped, tag = 'scoped memory for transformer_forward.10']
    #allocation4 [shape = 's32[1]{0}', space=sflag, size = 0x4, scoped, tag = 'scoped memory for transformer_forward.10']
    #allocation5 [shape = 'u8[512]{0}', space=vmem, size = 0x400, scoped, tag = 'input window, operand 1, single buffered']
    #allocation6 [shape = 's32[1]{0}', space=sflag, size = 0x4, scoped, tag = 'scoped memory for transformer_forward.10']
    #allocation7 [shape = 'u8[512]{0}', space=vmem, size = 0x400, scoped, tag = 'input window, operand 2, single buffered']
    #allocation8 [shape = 'u8[8192]{0}', space=vmem, size = 0x2000, scoped, tag = 'input window, operand 3, single buffered']
    #allocation9 [shape = 's32[1]{0}', space=sflag, size = 0x4, scoped, tag = 'scoped memory for transformer_forward.10']
    #allocation10 [shape = 'u8[512]{0}', space=vmem, size = 0x400, scoped, tag = 'input window, operand 4, single buffered']
    #allocation11 [shape = 'u8[4096]{0}', space=vmem, size = 0x1000, scoped, tag = 'output window, operand 0, single buffered']
    %10 = vsyncpa [#allocation3], 0
    %11 = vsyncpa [#allocation6], 0
    %12 = vsyncpa [#allocation9], 0
    %13 = vsyncpa [#allocation4], 0
    // Predicated region
    $region2: #{transformer_forward.10} parent=1 // pred_check
      _
    $region3: #{transformer_forward.10} parent=1 // pred_check_branch
      %15 = sbr.rel (0) target = $region5
    $region4: #{transformer_forward.10} parent=1 // pred_region
      %s17 = ssub.s32 128, 128
      %18 = vsyncadd [#allocation3], %s17
      %s19 = sshll.u32 [#allocation2], 4
      %s20 = int_to_ptr.vmem [resolvable:$true] %s19
      %25 = dma.hbm_to_vmem [thread:$0]  %s0, 128, %s20, [#allocation3], 64, 64, 4
    $region5: #{transformer_forward.10} parent=1 // pred_fallthru
      _
    // Predicated region
    $region6: #{transformer_forward.10} parent=1 // pred_check
      _
    $region7: #{transformer_forward.10} parent=1 // pred_check_branch
      %27 = sbr.rel (0) target = $region9
    $region8: #{transformer_forward.10} parent=1 // pred_region
      %s29 = ssub.s32 16, 16
      %30 = vsyncadd [#allocation6], %s29
      %s32 = sshll.u32 [#allocation5], 4
      %s33 = int_to_ptr.vmem [resolvable:$true] %s32
      %35 = dma.hbm_to_vmem [thread:$0]  %s1, 16, %s33, [#allocation6]
    $region9: #{transformer_forward.10} parent=1 // pred_fallthru
      _
    // Predicated region
    $region10: #{transformer_forward.10} parent=1 // pred_check
      _
    $region11: #{transformer_forward.10} parent=1 // pred_check_branch
      %37 = sbr.rel (0) target = $region13
    $region12: #{transformer_forward.10} parent=1 // pred_region
      %s39 = ssub.s32 16, 16
      %40 = vsyncadd [#allocation6], %s39
      %s42 = sshll.u32 [#allocation7], 4
      %s43 = int_to_ptr.vmem [resolvable:$true] %s42
      %45 = dma.hbm_to_vmem [thread:$0]  %s2, 16, %s43, [#allocation6]
    $region13: #{transformer_forward.10} parent=1 // pred_fallthru
      _
    // Predicated region
    $region14: #{transformer_forward.10} parent=1 // pred_check
      _
    $region15: #{transformer_forward.10} parent=1 // pred_check_branch
      %47 = sbr.rel (0) target = $region17
    $region16: #{transformer_forward.10} parent=1 // pred_region
      %s49 = ssub.s32 256, 256
      %50 = vsyncadd [#allocation9], %s49
      %s51 = sshll.u32 [#allocation8], 4
      %s52 = int_to_ptr.vmem [resolvable:$true] %s51
      %57 = dma.hbm_to_vmem [thread:$0]  %s3, 256, %s52, [#allocation9], 64, 64, 4
    $region17: #{transformer_forward.10} parent=1 // pred_fallthru
      _
    // Predicated region
    $region18: #{transformer_forward.10} parent=1 // pred_check
      _
    $region19: #{transformer_forward.10} parent=1 // pred_check_branch
      %59 = sbr.rel (0) target = $region21
    $region20: #{transformer_forward.10} parent=1 // pred_region
      %s61 = ssub.s32 16, 16
      %62 = vsyncadd [#allocation9], %s61
      %s64 = sshll.u32 [#allocation10], 4
      %s65 = int_to_ptr.vmem [resolvable:$true] %s64
      %67 = dma.hbm_to_vmem [thread:$0]  %s4, 16, %s65, [#allocation9]
    $region21: #{transformer_forward.10} parent=1 // pred_fallthru
      _
    // Predicated region
    $region22: #{transformer_forward.10} parent=1 // pred_check
      _
    $region23: #{transformer_forward.10} parent=1 // pred_check_branch
      %69 = sbr.rel (0) target = $region25
    $region24: #{transformer_forward.10} parent=1 // pred_region
      %70 = dma.done [#allocation3], 128
    $region25: #{transformer_forward.10} parent=1 // pred_fallthru
      _
    // Predicated region
    $region26: #{transformer_forward.10} parent=1 // pred_check
      _
    $region27: #{transformer_forward.10} parent=1 // pred_check_branch
      %72 = sbr.rel (0) target = $region29
    $region28: #{transformer_forward.10} parent=1 // pred_region
      %73 = dma.done [#allocation6], 16
    $region29: #{transformer_forward.10} parent=1 // pred_fallthru
      _
    // Predicated region
    $region30: #{transformer_forward.10} parent=1 // pred_check
      _
    $region31: #{transformer_forward.10} parent=1 // pred_check_branch
      %75 = sbr.rel (0) target = $region33
    $region32: #{transformer_forward.10} parent=1 // pred_region
      %76 = dma.done [#allocation6], 16
    $region33: #{transformer_forward.10} parent=1 // pred_fallthru
      _
    // Predicated region
    $region34: #{transformer_forward.10} parent=1 // pred_check
      _
    $region35: #{transformer_forward.10} parent=1 // pred_check_branch
      %78 = sbr.rel (0) target = $region37
    $region36: #{transformer_forward.10} parent=1 // pred_region
      %79 = dma.done [#allocation9], 256
    $region37: #{transformer_forward.10} parent=1 // pred_fallthru
      _
    // Predicated region
    $region38: #{transformer_forward.10} parent=1 // pred_check
      _
    $region39: #{transformer_forward.10} parent=1 // pred_check_branch
      %81 = sbr.rel (0) target = $region41
    $region40: #{transformer_forward.10} parent=1 // pred_region
      %82 = dma.done [#allocation9], 16
    $region41: #{transformer_forward.10} parent=1 // pred_fallthru
      _
    %v84 = vld [vmem:[#allocation2] sm:$0xf]
    %v85 = vld [vmem:[#allocation2 + $0x4] sm:$0xf]
    %v86 = vunpack.c.l.bf16 %v84
    %v87 = vunpack.c.l.bf16 %v85
    %vm88 = vcmask 261120
    %v89 = vsel %vm88, %v86, 0.0
    %90 = vadd.xlane.f32.xlu0 %v89
    %v91 = vpop.xlane.xlu0 %90
    %v92 = vsel %vm88, %v87, 0.0
    %93 = vadd.xlane.f32.xlu0 %v92
    %v94 = vpop.xlane.xlu0 %93
    %v95 = vrcp.pop 32.0
    %v96 = vmul.f32 %v91, %v95
    %v97 = vmul.f32 %v94, %v95
    %v98 = vsub.f32 %v86, %v96
    %v99 = vsub.f32 %v87, %v97
    %v100 = vmul.f32 %v98, %v98
    %v101 = vmul.f32 %v99, %v99
    %v102 = vsel %vm88, %v100, 0.0
    %103 = vadd.xlane.f32.xlu0 %v102
    %v104 = vpop.xlane.xlu0 %103
    %v105 = vsel %vm88, %v101, 0.0
    %106 = vadd.xlane.f32.xlu0 %v105
    %v107 = vpop.xlane.xlu0 %106
    %v108 = vmul.f32 %v104, %v95
    %v109 = vmul.f32 %v107, %v95
    %v110 = vadd.f32 %v108, 1e-05
    %v111 = vadd.f32 %v109, 1e-05
    %v112 = vrsqrt.pop %v110
    %v113 = vrsqrt.pop %v111
    %v114 = vmul.f32 %v98, %v112
    %v115 = vmul.f32 %v99, %v113
    %v116 = vld [vmem:[#allocation5] sm:$0x1]
    %v118 = vlaneseq
    %v119 = vshrl.u32 %v118, 7
    %v120 = vsub.s32 0, %v119
    %v121 = vrot.slane %v116, %v120
    %v123 = vmul.f32 %v114, %v121
    %v124 = vmul.f32 %v115, %v121
    %v125 = vld [vmem:[#allocation7] sm:$0x1]
    %v127 = vlaneseq
    %v128 = vshrl.u32 %v127, 7
    %v129 = vsub.s32 0, %v128
    %v130 = vrot.slane %v125, %v129
    %v132 = vadd.f32 %v123, %v130
    %v133 = vadd.f32 %v124, %v130
    %v134 = vpack.c.bf16 %v133, %v132
    %v135 = vld [vmem:[#allocation8] sm:$0xf]
    %v136 = vld [vmem:[#allocation8 + $0x4] sm:$0xf]
    %v137 = vld [vmem:[#allocation8 + $0x8] sm:$0xf]
    %v138 = vld [vmem:[#allocation8 + $0xc] sm:$0xf]
    %v139 = vld [vmem:[#allocation10] sm:$0x1]
    %v141 = vlaneseq
    %v142 = vshrl.u32 %v141, 7
    %v143 = vsub.s32 0, %v142
    %v144 = vrot.slane %v139, %v143
    %v150 = vunpack.c.l.b16 %v135
    %v151 = vunpack.c.l.b16 %v136
    %v152 = vunpack.c.l.b16 %v137
    %v153 = vunpack.c.l.b16 %v138
    %v154 = vpack.c.b16 %v151, %v150
    %v155 = vpack.c.b16 %v153, %v152
    %v159 = vsel %vm88, %v134, 0
    %161 = vmatprep.subr.bf16.mxu0 0
    %162 = vmatpush1.bf16.msra.mxu0 %v154
    %163 = vmatprep.subr.bf16.mxu0 0
    %164 = vmatpush1.bf16.msra.mxu0 %v155
    %165 = vmatprep.subr.bf16.mxu0 0
    %166 = vmatpush1.bf16.msra.mxu0 0
    %167 = vmatprep.subr.bf16.mxu0 0
    %168 = vmatpush1.bf16.msra.mxu0 0
    %169 = vmatprep.subr.bf16.mxu0 0
    %170 = vmatpush1.bf16.msra.mxu0 0
    %171 = vmatprep.subr.bf16.mxu0 0
    %172 = vmatpush1.bf16.msra.mxu0 0
    %173 = vmatprep.subr.bf16.mxu0 0
    %174 = vmatpush1.bf16.msra.mxu0 0
    %175 = vmatprep.subr.bf16.mxu0 0
    %176 = vmatpush1.bf16.msra.mxu0 0
    %177 = vmatprep.subr.bf16.mxu0 0
    %178 = vmatpush1.bf16.msra.mxu0 0
    %179 = vmatprep.subr.bf16.mxu0 0
    %180 = vmatpush1.bf16.msra.mxu0 0
    %181 = vmatprep.subr.bf16.mxu0 0
    %182 = vmatpush1.bf16.msra.mxu0 0
    %183 = vmatprep.subr.bf16.mxu0 0
    %184 = vmatpush1.bf16.msra.mxu0 0
    %185 = vmatprep.subr.bf16.mxu0 0
    %186 = vmatpush1.bf16.msra.mxu0 0
    %187 = vmatprep.subr.bf16.mxu0 0
    %188 = vmatpush1.bf16.msra.mxu0 0
    %189 = vmatprep.subr.bf16.mxu0 0
    %190 = vmatpush1.bf16.msra.mxu0 0
    %191 = vmatprep.subr.bf16.mxu0 0
    %192 = vmatpush1.bf16.msra.mxu0 0
    %193 = vmatprep.mubr.bf16.mxu0 0
    %194 = vmatmul.mubr.bf16.gmra.mrb[0].mxu0 %v159
    %v195 = vpop.f32.mrb[0].mxu0
    %v196 = vadd.f32 %v144, %v195
    %v197 = vpop.f32.mrb[0].mxu0
    %v198 = vpop.f32.mrb[0].mxu0
    %v199 = vadd.f32 %v144, %v198
    %v200 = vpop.f32.mrb[0].mxu0
    %201 = vdwg.mxu0
    %v202 = vpack.c.bf16 %v199, %v196
    %v204 = vunpack.c.l.b16 %v202
    %v205 = vunpack.c.h.b16 %v202
    %v206 = vpack.c.b16 %v204, %v204
    %v207 = vpack.c.b16 %v205, %v205
    %vm210 = vcmask 781312
    %211 = vst.msk [vmem:[#allocation11] sm:$0xf] %vm210, %v206
    %212 = vst.msk [vmem:[#allocation11 + $0x4] sm:$0xf] %vm210, %v207
    // Predicated region
    $region42: #{transformer_forward.10} parent=1 // pred_check
      _
    $region43: #{transformer_forward.10} parent=1 // pred_check_branch
      %214 = sbr.rel (0) target = $region45
    $region44: #{transformer_forward.10} parent=1 // pred_region
      %s216 = ssub.s32 128, 128
      %217 = vsyncadd [#allocation4], %s216
      %s218 = sshll.u32 [#allocation11], 4
      %s219 = int_to_ptr.vmem [resolvable:$true] %s218
      %224 = dma.vmem_to_hbm [thread:$0]  %s219, 128, %s5, [#allocation4], 64, 64, 4
    $region45: #{transformer_forward.10} parent=1 // pred_fallthru
      _
    // Predicated region
    $region46: #{transformer_forward.10} parent=1 // pred_check
      _
    $region47: #{transformer_forward.10} parent=1 // pred_check_branch
      %226 = sbr.rel (0) target = $region49
    $region48: #{transformer_forward.10} parent=1 // pred_region
      %227 = dma.done [#allocation4], 128
    $region49: #{transformer_forward.10} parent=1 // pred_fallthru
      _
    %228 = vsyncpa [#allocation3], 1
    %229 = vsyncpa [#allocation6], 1
    %230 = vsyncpa [#allocation9], 1
    %231 = vsyncpa [#allocation4], 1

// kernel: transformer_forward.11
$region0: #{transformer_forward.11}
  #allocation0 [shape = 'u32[]', space=smem, size = 0x4, offset = 0x4, fixed_abs, tag = 'smem constant byte address 0x4 - core index']
  #allocation1 [shape = 'u32[144,128]{1,0:T(1,128)}', space=vmem, size = 0x12000, scoped, tag = 'internal scratch']
  %s0 = inlined_call_operand.hbm [shape: bf16[8,8,8], index: 0, kind: input, shape index: {}]
  %s1 = inlined_call_operand.hbm [shape: bf16[8,8,8], index: 1, kind: input, shape index: {}]
  %s2 = inlined_call_operand.hbm [shape: bf16[8,8,8], index: 2, kind: input, shape index: {}]
  %s3 = inlined_call_operand.hbm [shape: bf16[8,8,8], index: 3, kind: output, shape index: {}]
  %s4 = sld [smem:[#allocation0]]
  $region57: #{transformer_forward.11} parent=0
    _
  %s6 = ssub.s32 1, %s4
  %s7 = scalar_select 0, %s6, %s4
  $region1: #{transformer_forward.11} parent=0
    #allocation2 [shape = 'u8[16384]{0}', space=vmem, size = 0x4000, scoped, tag = 'input window, operand 0']
    #allocation3 [shape = 's32[2]{0}', space=sflag, size = 0x8, scoped, tag = 'scoped memory for transformer_forward.11']
    #allocation4 [shape = 's32[2]{0}', space=sflag, size = 0x8, scoped, tag = 'scoped memory for transformer_forward.11']
    #allocation5 [shape = 'u8[16384]{0}', space=vmem, size = 0x4000, scoped, tag = 'input window, operand 1']
    #allocation6 [shape = 's32[2]{0}', space=sflag, size = 0x8, scoped, tag = 'scoped memory for transformer_forward.11']
    #allocation7 [shape = 'u8[16384]{0}', space=vmem, size = 0x4000, scoped, tag = 'input window, operand 2']
    #allocation8 [shape = 'u8[16384]{0}', space=vmem, size = 0x4000, scoped, tag = 'output window, operand 0']
    %8 = vsyncpa [#allocation3], 0
    %s9 = scalar_lea.sflag [#allocation3], 1
    %10 = vsyncpa %s9, 0
    %11 = vsyncpa [#allocation6], 0
    %s12 = scalar_lea.sflag [#allocation6], 1
    %13 = vsyncpa %s12, 0
    %14 = vsyncpa [#allocation4], 0
    %s15 = scalar_lea.sflag [#allocation4], 1
    %16 = vsyncpa %s15, 0
    loop: start=0, step=1, limit=4
    $region2: #{transformer_forward.11} parent=1 // loop_pre_header
      _
    $region3: #{transformer_forward.11} parent=1 // loop_header
      %s18 = sphi 0, %s22
      %p19 = scmp.ge.s32.totalorder %s18, 4
      %s28 = sphi 0, %s30
      %s31 = sphi 0, %s28
      %s32 = sphi 0, %s31
      %s48 = sphi 0, %s32
      %s54 = sphi 0, %s56
      %s57 = sphi 0, %s54
      %s58 = sphi 0, %s57
      %s74 = sphi 0, %s58
      %s80 = sphi 0, %s82
      %s83 = sphi 0, %s80
      %s84 = sphi 0, %s83
      %s100 = sphi 0, %s84
      %s106 = sphi 0, %s108
      %s109 = sphi 0, %s106
      %s110 = sphi 0, %s109
      %s126 = sphi 0, %s110
    $region4: #{transformer_forward.11} parent=1 // loop_header_branch
      %21 = sbr.rel (%p19) target = $region8
    $region5: #{transformer_forward.11} parent=1 // loop_body
      %s23 = ssub.s32 %s18, 1
      %s24 = ssub.s32 %s18, 2
      %s25 = sadd.s32 %s18, 1
      %s26 = ssub.s32 %s18, %s25
      %p27 = scmp.eq.s32.totalorder %s26, 0
      %s29 = sadd.s32 %s28, 1
      %s30 = scalar_select %p27, %s28, %s29
      %p33 = pneg %p27
      %p34 = scmp.eq.s32.totalorder %s18, 1
      %p35 = por %p33, %p34
      %p36 = scmp.ne.s32.totalorder %s28, %s31
      %p37 = scmp.eq.s32.totalorder %s18, 0
      %p38 = por %p36, %p37
      %p39 = scmp.ne.s32.totalorder %s28, %s31
      %p40 = scmp.eq.s32.totalorder %s23, 1
      %p41 = por %p39, %p40
      %p42 = scmp.ne.s32.totalorder %s31, %s32
      %p43 = scmp.eq.s32.totalorder %s23, 0
      %p44 = por %p42, %p43
      %p45 = scmp.ne.s32.totalorder %s31, %s32
      %p46 = scmp.eq.s32.totalorder %s24, 1
      %p47 = por %p45, %p46
      %p49 = scmp.ne.s32.totalorder %s32, %s48
      %p50 = scmp.eq.s32.totalorder %s24, 0
      %p51 = por %p49, %p50
      %s52 = ssub.s32 %s18, %s25
      %p53 = scmp.eq.s32.totalorder %s52, 0
      %s55 = sadd.s32 %s54, 1
      %s56 = scalar_select %p53, %s54, %s55
      %p59 = pneg %p53
      %p60 = scmp.eq.s32.totalorder %s18, 1
      %p61 = por %p59, %p60
      %p62 = scmp.ne.s32.totalorder %s54, %s57
      %p63 = scmp.eq.s32.totalorder %s18, 0
      %p64 = por %p62, %p63
      %p65 = scmp.ne.s32.totalorder %s54, %s57
      %p66 = scmp.eq.s32.totalorder %s23, 1
      %p67 = por %p65, %p66
      %p68 = scmp.ne.s32.totalorder %s57, %s58
      %p69 = scmp.eq.s32.totalorder %s23, 0
      %p70 = por %p68, %p69
      %p71 = scmp.ne.s32.totalorder %s57, %s58
      %p72 = scmp.eq.s32.totalorder %s24, 1
      %p73 = por %p71, %p72
      %p75 = scmp.ne.s32.totalorder %s58, %s74
      %p76 = scmp.eq.s32.totalorder %s24, 0
      %p77 = por %p75, %p76
      %s78 = ssub.s32 %s18, %s25
      %p79 = scmp.eq.s32.totalorder %s78, 0
      %s81 = sadd.s32 %s80, 1
      %s82 = scalar_select %p79, %s80, %s81
      %p85 = pneg %p79
      %p86 = scmp.eq.s32.totalorder %s18, 1
      %p87 = por %p85, %p86
      %p88 = scmp.ne.s32.totalorder %s80, %s83
      %p89 = scmp.eq.s32.totalorder %s18, 0
      %p90 = por %p88, %p89
      %p91 = scmp.ne.s32.totalorder %s80, %s83
      %p92 = scmp.eq.s32.totalorder %s23, 1
      %p93 = por %p91, %p92
      %p94 = scmp.ne.s32.totalorder %s83, %s84
      %p95 = scmp.eq.s32.totalorder %s23, 0
      %p96 = por %p94, %p95
      %p97 = scmp.ne.s32.totalorder %s83, %s84
      %p98 = scmp.eq.s32.totalorder %s24, 1
      %p99 = por %p97, %p98
      %p101 = scmp.ne.s32.totalorder %s84, %s100
      %p102 = scmp.eq.s32.totalorder %s24, 0
      %p103 = por %p101, %p102
      %s104 = ssub.s32 %s18, %s25
      %p105 = scmp.eq.s32.totalorder %s104, 0
      %s107 = sadd.s32 %s106, 1
      %s108 = scalar_select %p105, %s106, %s107
      %p111 = pneg %p105
      %p112 = scmp.eq.s32.totalorder %s18, 1
      %p113 = por %p111, %p112
      %p114 = scmp.ne.s32.totalorder %s106, %s109
      %p115 = scmp.eq.s32.totalorder %s18, 0
      %p116 = por %p114, %p115
      %p117 = scmp.ne.s32.totalorder %s106, %s109
      %p118 = scmp.eq.s32.totalorder %s23, 1
      %p119 = por %p117, %p118
      %p120 = scmp.ne.s32.totalorder %s109, %s110
      %p121 = scmp.eq.s32.totalorder %s23, 0
      %p122 = por %p120, %p121
      %p123 = scmp.ne.s32.totalorder %s109, %s110
      %p124 = scmp.eq.s32.totalorder %s24, 1
      %p125 = por %p123, %p124
      %p127 = scmp.ne.s32.totalorder %s110, %s126
      %p128 = scmp.eq.s32.totalorder %s24, 0
      %p129 = por %p127, %p128
      %p130 = scmp.le.s32.totalorder 1, %s18
      %p131 = scmp.lt.s32.totalorder %s18, 3
      %p132 = pnand %p130, %p131
      %p133 = pneg %p132
      // Predicated region
      $region9: #{transformer_forward.11} parent=5 // pred_check
        _
      $region10: #{transformer_forward.11} parent=5 // pred_check_branch
        %135 = sbr.rel (%p132) target = $region12
      $region11: #{transformer_forward.11} parent=5 // pred_region
        %s136 = ssub.s32 %s18, 1
      $region12: #{transformer_forward.11} parent=5 // pred_fallthru
        _
      %p137 = scmp.lt.s32.totalorder %s18, 2
      // Predicated region
      $region13: #{transformer_forward.11} parent=5 // pred_check
        %p138 = pneg %p137
      $region14: #{transformer_forward.11} parent=5 // pred_check_branch
        %140 = sbr.rel (%p138) target = $region16
      $region15: #{transformer_forward.11} parent=5 // pred_region
        // Predicated region
        $region17: #{transformer_forward.11} parent=15 // pred_check
          %p141 = pneg %p38
        $region18: #{transformer_forward.11} parent=15 // pred_check_branch
          %143 = sbr.rel (%p141) target = $region20
        $region19: #{transformer_forward.11} parent=15 // pred_region
          %s144 = sand.u32 %s28, 1
          %s145 = scalar_lea.sflag [#allocation3], %s144
          %s146 = sand.u32 %s28, 1
          %s147 = smul.addr %s146, 16
          %s148 = scalar_lea.vmem [#allocation2], %s147
          %s149 = smul.u32 4, %s18
          %s151 = ssub.s32 256, 256
          %152 = vsyncadd %s145, %s151
          %s153 = smul.addr %s149, 64
          %s154 = scalar_lea.hbm %s0, %s153
          %s155 = sshll.u32 %s148, 4
          %s156 = int_to_ptr.vmem [resolvable:$true] %s155
          %161 = dma.hbm_to_vmem [thread:$0]  %s154, 256, %s156, %s145, 64, 64, 4
        $region20: #{transformer_forward.11} parent=15 // pred_fallthru
          _
        // Predicated region
        $region21: #{transformer_forward.11} parent=15 // pred_check
          %p162 = pneg %p64
        $region22: #{transformer_forward.11} parent=15 // pred_check_branch
          %164 = sbr.rel (%p162) target = $region24
        $region23: #{transformer_forward.11} parent=15 // pred_region
          %s165 = sand.u32 %s18, 1
          %s166 = scalar_lea.sflag [#allocation6], %s165
          %s167 = sand.u32 %s54, 1
          %s168 = smul.addr %s167, 16
          %s169 = scalar_lea.vmem [#allocation5], %s168
          %s170 = smul.u32 4, %s18
          %s172 = ssub.s32 256, 256
          %173 = vsyncadd %s166, %s172
          %s174 = smul.addr %s170, 64
          %s175 = scalar_lea.hbm %s1, %s174
          %s176 = sshll.u32 %s169, 4
          %s177 = int_to_ptr.vmem [resolvable:$true] %s176
          %182 = dma.hbm_to_vmem [thread:$0]  %s175, 256, %s177, %s166, 64, 64, 4
        $region24: #{transformer_forward.11} parent=15 // pred_fallthru
          _
        // Predicated region
        $region25: #{transformer_forward.11} parent=15 // pred_check
          %p183 = pneg %p90
        $region26: #{transformer_forward.11} parent=15 // pred_check_branch
          %185 = sbr.rel (%p183) target = $region28
        $region27: #{transformer_forward.11} parent=15 // pred_region
          %s186 = sand.u32 %s18, 1
          %s187 = scalar_lea.sflag [#allocation6], %s186
          %s188 = sand.u32 %s80, 1
          %s189 = smul.addr %s188, 16
          %s190 = scalar_lea.vmem [#allocation7], %s189
          %s191 = smul.u32 4, %s18
          %s193 = ssub.s32 256, 256
          %194 = vsyncadd %s187, %s193
          %s195 = smul.addr %s191, 64
          %s196 = scalar_lea.hbm %s2, %s195
          %s197 = sshll.u32 %s190, 4
          %s198 = int_to_ptr.vmem [resolvable:$true] %s197
          %203 = dma.hbm_to_vmem [thread:$0]  %s196, 256, %s198, %s187, 64, 64, 4
        $region28: #{transformer_forward.11} parent=15 // pred_fallthru
          _
      $region16: #{transformer_forward.11} parent=5 // pred_fallthru
        _
      %p204 = scmp.le.s32.totalorder 1, %s18
      %p205 = scmp.lt.s32.totalorder %s18, 3
      %p206 = pnand %p204, %p205
      %p207 = pneg %p206
      // Predicated region
      $region29: #{transformer_forward.11} parent=5 // pred_check
        _
      $region30: #{transformer_forward.11} parent=5 // pred_check_branch
        %209 = sbr.rel (%p206) target = $region32
      $region31: #{transformer_forward.11} parent=5 // pred_region
        %s210 = ssub.s32 %s18, 1
        %s211 = sand.u32 %s31, 1
        %s212 = scalar_lea.sflag [#allocation3], %s211
        %s213 = sand.u32 %s31, 1
        %s214 = smul.addr %s213, 16
        %s215 = scalar_lea.vmem [#allocation2], %s214
        // Predicated region
        $region33: #{transformer_forward.11} parent=31 // pred_check
          %p216 = pneg %p44
        $region34: #{transformer_forward.11} parent=31 // pred_check_branch
          %218 = sbr.rel (%p216) target = $region36
        $region35: #{transformer_forward.11} parent=31 // pred_region
          %219 = dma.done %s212, 256
        $region36: #{transformer_forward.11} parent=31 // pred_fallthru
          _
        %s220 = sand.u32 %s23, 1
        %s221 = scalar_lea.sflag [#allocation6], %s220
        %s222 = sand.u32 %s57, 1
        %s223 = smul.addr %s222, 16
        %s224 = scalar_lea.vmem [#allocation5], %s223
        // Predicated region
        $region37: #{transformer_forward.11} parent=31 // pred_check
          %p225 = pneg %p70
        $region38: #{transformer_forward.11} parent=31 // pred_check_branch
          %227 = sbr.rel (%p225) target = $region40
        $region39: #{transformer_forward.11} parent=31 // pred_region
          %228 = dma.done %s221, 256
        $region40: #{transformer_forward.11} parent=31 // pred_fallthru
          _
        %s229 = sand.u32 %s23, 1
        %s230 = scalar_lea.sflag [#allocation6], %s229
        %s231 = sand.u32 %s83, 1
        %s232 = smul.addr %s231, 16
        %s233 = scalar_lea.vmem [#allocation7], %s232
        // Predicated region
        $region41: #{transformer_forward.11} parent=31 // pred_check
          %p234 = pneg %p96
        $region42: #{transformer_forward.11} parent=31 // pred_check_branch
          %236 = sbr.rel (%p234) target = $region44
        $region43: #{transformer_forward.11} parent=31 // pred_region
          %237 = dma.done %s230, 256
        $region44: #{transformer_forward.11} parent=31 // pred_fallthru
          _
        %s238 = sand.u32 %s31, 1
        %s239 = scalar_lea.sflag [#allocation3], %s238
        %s240 = sand.u32 %s31, 1
        %s241 = smul.addr %s240, 16
        %s242 = scalar_lea.vmem [#allocation2], %s241
        %p243 = pneg %p44
        %p244 = pneg %p41
        %s245 = sand.u32 %s23, 1
        %s246 = scalar_lea.sflag [#allocation6], %s245
        %s247 = sand.u32 %s57, 1
        %s248 = smul.addr %s247, 16
        %s249 = scalar_lea.vmem [#allocation5], %s248
        %p250 = pneg %p70
        %p251 = pneg %p67
        %s252 = sand.u32 %s23, 1
        %s253 = scalar_lea.sflag [#allocation6], %s252
        %s254 = sand.u32 %s83, 1
        %s255 = smul.addr %s254, 16
        %s256 = scalar_lea.vmem [#allocation7], %s255
        %p257 = pneg %p96
        %p258 = pneg %p93
        %p259 = pneg %p122
        %p260 = pneg %p119
        %s261 = sand.u32 %s109, 1
        %s262 = scalar_lea.sflag [#allocation4], %s261
        %s263 = sand.u32 %s109, 1
        %s264 = smul.addr %s263, 16
        %s265 = scalar_lea.vmem [#allocation8], %s264
        %s266 = smul.u32 4, %s23
        %s267 = smul.u32 4, %s23
        %s268 = smul.u32 4, %s23
        %s269 = smul.u32 4, %s23
        %v271 = vld [vmem:[%s215] sm:$0xf]
        %v272 = vld [vmem:[%s215 + $0x4] sm:$0xf]
        %v273 = vld [vmem:[%s215 + $0x8] sm:$0xf]
        %v274 = vld [vmem:[%s215 + $0xc] sm:$0xf]
        %v275 = vld [vmem:[%s224] sm:$0xf]
        %v276 = vld [vmem:[%s224 + $0x4] sm:$0xf]
        %v277 = vld [vmem:[%s224 + $0x8] sm:$0xf]
        %v278 = vld [vmem:[%s224 + $0xc] sm:$0xf]
        %v279 = vld [vmem:[%s233] sm:$0xf]
        %v280 = vld [vmem:[%s233 + $0x4] sm:$0xf]
        %v281 = vld [vmem:[%s233 + $0x8] sm:$0xf]
        %v282 = vld [vmem:[%s233 + $0xc] sm:$0xf]
        %vm283 = vcmask 64512
        %v285 = vsel %vm283, %v271, 0
        %v288 = vsel %vm283, %v275, 0
        %290 = vmatprep.subr.bf16.mxu0 0
        %291 = vmatpush1.bf16.xpose.msra.mxu0 %v288
        %292 = vmatprep.subr.bf16.mxu0 0
        %293 = vmatpush1.bf16.xpose.msra.mxu0 0
        %294 = vmatprep.subr.bf16.mxu0 0
        %295 = vmatpush1.bf16.xpose.msra.mxu0 0
        %296 = vmatprep.subr.bf16.mxu0 0
        %297 = vmatpush1.bf16.xpose.msra.mxu0 0
        %298 = vmatprep.subr.bf16.mxu0 0
        %299 = vmatpush1.bf16.xpose.msra.mxu0 0
        %300 = vmatprep.subr.bf16.mxu0 0
        %301 = vmatpush1.bf16.xpose.msra.mxu0 0
        %302 = vmatprep.subr.bf16.mxu0 0
        %303 = vmatpush1.bf16.xpose.msra.mxu0 0
        %304 = vmatprep.subr.bf16.mxu0 0
        %305 = vmatpush1.bf16.xpose.msra.mxu0 0
        %306 = vmatprep.subr.bf16.mxu0 0
        %307 = vmatpush1.bf16.xpose.msra.mxu0 0
        %308 = vmatprep.subr.bf16.mxu0 0
        %309 = vmatpush1.bf16.xpose.msra.mxu0 0
        %310 = vmatprep.subr.bf16.mxu0 0
        %311 = vmatpush1.bf16.xpose.msra.mxu0 0
        %312 = vmatprep.subr.bf16.mxu0 0
        %313 = vmatpush1.bf16.xpose.msra.mxu0 0
        %314 = vmatprep.subr.bf16.mxu0 0
        %315 = vmatpush1.bf16.xpose.msra.mxu0 0
        %316 = vmatprep.subr.bf16.mxu0 0
        %317 = vmatpush1.bf16.xpose.msra.mxu0 0
        %318 = vmatprep.subr.bf16.mxu0 0
        %319 = vmatpush1.bf16.xpose.msra.mxu0 0
        %320 = vmatprep.subr.bf16.mxu0 0
        %321 = vmatpush1.bf16.xpose.msra.mxu0 0
        %322 = vmatprep.mubr.bf16.mxu0 0
        %323 = vmatmul.mubr.bf16.gmra.mrb[0].mxu0 %v285
        %v324 = vpop.f32.mrb[0].mxu0
        %v325 = vadd.f32 0.0, %v324
        %v326 = vpop.f32.mrb[0].mxu0
        %v327 = vpop.f32.mrb[0].mxu0
        %v328 = vpop.f32.mrb[0].mxu0
        %329 = vdwg.mxu0
        %v331 = vsel %vm283, %v272, 0
        %v334 = vsel %vm283, %v276, 0
        %336 = vmatprep.subr.bf16.mxu0 0
        %337 = vmatpush1.bf16.xpose.msra.mxu0 %v334
        %338 = vmatprep.subr.bf16.mxu0 0
        %339 = vmatpush1.bf16.xpose.msra.mxu0 0
        %340 = vmatprep.subr.bf16.mxu0 0
        %341 = vmatpush1.bf16.xpose.msra.mxu0 0
        %342 = vmatprep.subr.bf16.mxu0 0
        %343 = vmatpush1.bf16.xpose.msra.mxu0 0
        %344 = vmatprep.subr.bf16.mxu0 0
        %345 = vmatpush1.bf16.xpose.msra.mxu0 0
        %346 = vmatprep.subr.bf16.mxu0 0
        %347 = vmatpush1.bf16.xpose.msra.mxu0 0
        %348 = vmatprep.subr.bf16.mxu0 0
        %349 = vmatpush1.bf16.xpose.msra.mxu0 0
        %350 = vmatprep.subr.bf16.mxu0 0
        %351 = vmatpush1.bf16.xpose.msra.mxu0 0
        %352 = vmatprep.subr.bf16.mxu0 0
        %353 = vmatpush1.bf16.xpose.msra.mxu0 0
        %354 = vmatprep.subr.bf16.mxu0 0
        %355 = vmatpush1.bf16.xpose.msra.mxu0 0
        %356 = vmatprep.subr.bf16.mxu0 0
        %357 = vmatpush1.bf16.xpose.msra.mxu0 0
        %358 = vmatprep.subr.bf16.mxu0 0
        %359 = vmatpush1.bf16.xpose.msra.mxu0 0
        %360 = vmatprep.subr.bf16.mxu0 0
        %361 = vmatpush1.bf16.xpose.msra.mxu0 0
        %362 = vmatprep.subr.bf16.mxu0 0
        %363 = vmatpush1.bf16.xpose.msra.mxu0 0
        %364 = vmatprep.subr.bf16.mxu0 0
        %365 = vmatpush1.bf16.xpose.msra.mxu0 0
        %366 = vmatprep.subr.bf16.mxu0 0
        %367 = vmatpush1.bf16.xpose.msra.mxu0 0
        %368 = vmatprep.mubr.bf16.mxu0 0
        %369 = vmatmul.mubr.bf16.gmra.mrb[0].mxu0 %v331
        %v370 = vpop.f32.mrb[0].mxu0
        %v371 = vadd.f32 0.0, %v370
        %v372 = vpop.f32.mrb[0].mxu0
        %v373 = vpop.f32.mrb[0].mxu0
        %v374 = vpop.f32.mrb[0].mxu0
        %375 = vdwg.mxu0
        %v377 = vsel %vm283, %v273, 0
        %v380 = vsel %vm283, %v277, 0
        %382 = vmatprep.subr.bf16.mxu0 0
        %383 = vmatpush1.bf16.xpose.msra.mxu0 %v380
        %384 = vmatprep.subr.bf16.mxu0 0
        %385 = vmatpush1.bf16.xpose.msra.mxu0 0
        %386 = vmatprep.subr.bf16.mxu0 0
        %387 = vmatpush1.bf16.xpose.msra.mxu0 0
        %388 = vmatprep.subr.bf16.mxu0 0
        %389 = vmatpush1.bf16.xpose.msra.mxu0 0
        %390 = vmatprep.subr.bf16.mxu0 0
        %391 = vmatpush1.bf16.xpose.msra.mxu0 0
        %392 = vmatprep.subr.bf16.mxu0 0
        %393 = vmatpush1.bf16.xpose.msra.mxu0 0
        %394 = vmatprep.subr.bf16.mxu0 0
        %395 = vmatpush1.bf16.xpose.msra.mxu0 0
        %396 = vmatprep.subr.bf16.mxu0 0
        %397 = vmatpush1.bf16.xpose.msra.mxu0 0
        %398 = vmatprep.subr.bf16.mxu0 0
        %399 = vmatpush1.bf16.xpose.msra.mxu0 0
        %400 = vmatprep.subr.bf16.mxu0 0
        %401 = vmatpush1.bf16.xpose.msra.mxu0 0
        %402 = vmatprep.subr.bf16.mxu0 0
        %403 = vmatpush1.bf16.xpose.msra.mxu0 0
        %404 = vmatprep.subr.bf16.mxu0 0
        %405 = vmatpush1.bf16.xpose.msra.mxu0 0
        %406 = vmatprep.subr.bf16.mxu0 0
        %407 = vmatpush1.bf16.xpose.msra.mxu0 0
        %408 = vmatprep.subr.bf16.mxu0 0
        %409 = vmatpush1.bf16.xpose.msra.mxu0 0
        %410 = vmatprep.subr.bf16.mxu0 0
        %411 = vmatpush1.bf16.xpose.msra.mxu0 0
        %412 = vmatprep.subr.bf16.mxu0 0
        %413 = vmatpush1.bf16.xpose.msra.mxu0 0
        %414 = vmatprep.mubr.bf16.mxu0 0
        %415 = vmatmul.mubr.bf16.gmra.mrb[0].mxu0 %v377
        %v416 = vpop.f32.mrb[0].mxu0
        %v417 = vadd.f32 0.0, %v416
        %v418 = vpop.f32.mrb[0].mxu0
        %v419 = vpop.f32.mrb[0].mxu0
        %v420 = vpop.f32.mrb[0].mxu0
        %421 = vdwg.mxu0
        %v423 = vsel %vm283, %v274, 0
        %v426 = vsel %vm283, %v278, 0
        %428 = vmatprep.subr.bf16.mxu0 0
        %429 = vmatpush1.bf16.xpose.msra.mxu0 %v426
        %430 = vmatprep.subr.bf16.mxu0 0
        %431 = vmatpush1.bf16.xpose.msra.mxu0 0
        %432 = vmatprep.subr.bf16.mxu0 0
        %433 = vmatpush1.bf16.xpose.msra.mxu0 0
        %434 = vmatprep.subr.bf16.mxu0 0
        %435 = vmatpush1.bf16.xpose.msra.mxu0 0
        %436 = vmatprep.subr.bf16.mxu0 0
        %437 = vmatpush1.bf16.xpose.msra.mxu0 0
        %438 = vmatprep.subr.bf16.mxu0 0
        %439 = vmatpush1.bf16.xpose.msra.mxu0 0
        %440 = vmatprep.subr.bf16.mxu0 0
        %441 = vmatpush1.bf16.xpose.msra.mxu0 0
        %442 = vmatprep.subr.bf16.mxu0 0
        %443 = vmatpush1.bf16.xpose.msra.mxu0 0
        %444 = vmatprep.subr.bf16.mxu0 0
        %445 = vmatpush1.bf16.xpose.msra.mxu0 0
        %446 = vmatprep.subr.bf16.mxu0 0
        %447 = vmatpush1.bf16.xpose.msra.mxu0 0
        %448 = vmatprep.subr.bf16.mxu0 0
        %449 = vmatpush1.bf16.xpose.msra.mxu0 0
        %450 = vmatprep.subr.bf16.mxu0 0
        %451 = vmatpush1.bf16.xpose.msra.mxu0 0
        %452 = vmatprep.subr.bf16.mxu0 0
        %453 = vmatpush1.bf16.xpose.msra.mxu0 0
        %454 = vmatprep.subr.bf16.mxu0 0
        %455 = vmatpush1.bf16.xpose.msra.mxu0 0
        %456 = vmatprep.subr.bf16.mxu0 0
        %457 = vmatpush1.bf16.xpose.msra.mxu0 0
        %458 = vmatprep.subr.bf16.mxu0 0
        %459 = vmatpush1.bf16.xpose.msra.mxu0 0
        %460 = vmatprep.mubr.bf16.mxu0 0
        %461 = vmatmul.mubr.bf16.gmra.mrb[0].mxu0 %v423
        %v462 = vpop.f32.mrb[0].mxu0
        %v463 = vadd.f32 0.0, %v462
        %v464 = vpop.f32.mrb[0].mxu0
        %v465 = vpop.f32.mrb[0].mxu0
        %v466 = vpop.f32.mrb[0].mxu0
        %467 = vdwg.mxu0
        %v468 = vmul.f32 %v325, 0.35355338
        %v469 = vmul.f32 %v371, 0.35355338
        %v470 = vmul.f32 %v417, 0.35355338
        %v471 = vmul.f32 %v463, 0.35355338
        %v472 = vsel %vm283, %v468, -inf
        %473 = vmax.xlane.f32.xlu0 %v472
        %v474 = vpop.xlane.xlu0 %473
        %v475 = vsel %vm283, %v469, -inf
        %476 = vmax.xlane.f32.xlu0 %v475
        %v477 = vpop.xlane.xlu0 %476
        %v478 = vsel %vm283, %v470, -inf
        %479 = vmax.xlane.f32.xlu0 %v478
        %v480 = vpop.xlane.xlu0 %479
        %v481 = vsel %vm283, %v471, -inf
        %482 = vmax.xlane.f32.xlu0 %v481
        %v483 = vpop.xlane.xlu0 %482
        %v484 = vsub.f32 %v468, %v474
        %v485 = vsub.f32 %v469, %v477
        %v486 = vsub.f32 %v470, %v480
        %v487 = vsub.f32 %v471, %v483
        %v488 = vmul.f32 %v484, 1.442695
        %v489 = vpow.pop %v488
        %v490 = vmul.f32 %v485, 1.442695
        %v491 = vpow.pop %v490
        %v492 = vmul.f32 %v486, 1.442695
        %v493 = vpow.pop %v492
        %v494 = vmul.f32 %v487, 1.442695
        %v495 = vpow.pop %v494
        %v496 = vsel %vm283, %v489, 0.0
        %497 = vadd.xlane.f32.xlu0 %v496
        %v498 = vpop.xlane.xlu0 %497
        %v499 = vsel %vm283, %v491, 0.0
        %500 = vadd.xlane.f32.xlu0 %v499
        %v501 = vpop.xlane.xlu0 %500
        %v502 = vsel %vm283, %v493, 0.0
        %503 = vadd.xlane.f32.xlu0 %v502
        %v504 = vpop.xlane.xlu0 %503
        %v505 = vsel %vm283, %v495, 0.0
        %506 = vadd.xlane.f32.xlu0 %v505
        %v507 = vpop.xlane.xlu0 %506
        %v508 = vrcp.pop %v498
        %v509 = vrcp.pop %v501
        %v510 = vrcp.pop %v504
        %v511 = vrcp.pop %v507
        %v512 = vmul.f32 %v489, %v508
        %v513 = vmul.f32 %v491, %v509
        %v514 = vmul.f32 %v493, %v510
        %v515 = vmul.f32 %v495, %v511
        %v516 = vpack.c.bf16 %v512, %v512
        %v517 = vpack.c.bf16 %v513, %v513
        %v518 = vpack.c.bf16 %v514, %v514
        %v519 = vpack.c.bf16 %v515, %v515
        %v521 = vsel %vm283, %v516, 0
        %vm523 = vcmask 1043456
        %v525 = vsel %vm523, %v279, 0
        %527 = vmatprep.subr.bf16.mxu0 0
        %528 = vmatpush1.bf16.msra.mxu0 %v525
        %529 = vmatprep.subr.bf16.mxu0 0
        %530 = vmatpush1.bf16.msra.mxu0 0
        %531 = vmatprep.subr.bf16.mxu0 0
        %532 = vmatpush1.bf16.msra.mxu0 0
        %533 = vmatprep.subr.bf16.mxu0 0
        %534 = vmatpush1.bf16.msra.mxu0 0
        %535 = vmatprep.subr.bf16.mxu0 0
        %536 = vmatpush1.bf16.msra.mxu0 0
        %537 = vmatprep.subr.bf16.mxu0 0
        %538 = vmatpush1.bf16.msra.mxu0 0
        %539 = vmatprep.subr.bf16.mxu0 0
        %540 = vmatpush1.bf16.msra.mxu0 0
        %541 = vmatprep.subr.bf16.mxu0 0
        %542 = vmatpush1.bf16.msra.mxu0 0
        %543 = vmatprep.subr.bf16.mxu0 0
        %544 = vmatpush1.bf16.msra.mxu0 0
        %545 = vmatprep.subr.bf16.mxu0 0
        %546 = vmatpush1.bf16.msra.mxu0 0
        %547 = vmatprep.subr.bf16.mxu0 0
        %548 = vmatpush1.bf16.msra.mxu0 0
        %549 = vmatprep.subr.bf16.mxu0 0
        %550 = vmatpush1.bf16.msra.mxu0 0
        %551 = vmatprep.subr.bf16.mxu0 0
        %552 = vmatpush1.bf16.msra.mxu0 0
        %553 = vmatprep.subr.bf16.mxu0 0
        %554 = vmatpush1.bf16.msra.mxu0 0
        %555 = vmatprep.subr.bf16.mxu0 0
        %556 = vmatpush1.bf16.msra.mxu0 0
        %557 = vmatprep.subr.bf16.mxu0 0
        %558 = vmatpush1.bf16.msra.mxu0 0
        %559 = vmatprep.mubr.bf16.mxu0 0
        %560 = vmatmul.mubr.bf16.gmra.mrb[0].mxu0 %v521
        %v561 = vpop.f32.mrb[0].mxu0
        %v562 = vadd.f32 0.0, %v561
        %v563 = vpop.f32.mrb[0].mxu0
        %v564 = vpop.f32.mrb[0].mxu0
        %v565 = vpop.f32.mrb[0].mxu0
        %566 = vdwg.mxu0
        %v568 = vsel %vm283, %v517, 0
        %v571 = vsel %vm523, %v280, 0
        %573 = vmatprep.subr.bf16.mxu0 0
        %574 = vmatpush1.bf16.msra.mxu0 %v571
        %575 = vmatprep.subr.bf16.mxu0 0
        %576 = vmatpush1.bf16.msra.mxu0 0
        %577 = vmatprep.subr.bf16.mxu0 0
        %578 = vmatpush1.bf16.msra.mxu0 0
        %579 = vmatprep.subr.bf16.mxu0 0
        %580 = vmatpush1.bf16.msra.mxu0 0
        %581 = vmatprep.subr.bf16.mxu0 0
        %582 = vmatpush1.bf16.msra.mxu0 0
        %583 = vmatprep.subr.bf16.mxu0 0
        %584 = vmatpush1.bf16.msra.mxu0 0
        %585 = vmatprep.subr.bf16.mxu0 0
        %586 = vmatpush1.bf16.msra.mxu0 0
        %587 = vmatprep.subr.bf16.mxu0 0
        %588 = vmatpush1.bf16.msra.mxu0 0
        %589 = vmatprep.subr.bf16.mxu0 0
        %590 = vmatpush1.bf16.msra.mxu0 0
        %591 = vmatprep.subr.bf16.mxu0 0
        %592 = vmatpush1.bf16.msra.mxu0 0
        %593 = vmatprep.subr.bf16.mxu0 0
        %594 = vmatpush1.bf16.msra.mxu0 0
        %595 = vmatprep.subr.bf16.mxu0 0
        %596 = vmatpush1.bf16.msra.mxu0 0
        %597 = vmatprep.subr.bf16.mxu0 0
        %598 = vmatpush1.bf16.msra.mxu0 0
        %599 = vmatprep.subr.bf16.mxu0 0
        %600 = vmatpush1.bf16.msra.mxu0 0
        %601 = vmatprep.subr.bf16.mxu0 0
        %602 = vmatpush1.bf16.msra.mxu0 0
        %603 = vmatprep.subr.bf16.mxu0 0
        %604 = vmatpush1.bf16.msra.mxu0 0
        %605 = vmatprep.mubr.bf16.mxu0 0
        %606 = vmatmul.mubr.bf16.gmra.mrb[0].mxu0 %v568
        %v607 = vpop.f32.mrb[0].mxu0
        %v608 = vadd.f32 0.0, %v607
        %v609 = vpop.f32.mrb[0].mxu0
        %v610 = vpop.f32.mrb[0].mxu0
        %v611 = vpop.f32.mrb[0].mxu0
        %612 = vdwg.mxu0
        %v614 = vsel %vm283, %v518, 0
        %v617 = vsel %vm523, %v281, 0
        %619 = vmatprep.subr.bf16.mxu0 0
        %620 = vmatpush1.bf16.msra.mxu0 %v617
        %621 = vmatprep.subr.bf16.mxu0 0
        %622 = vmatpush1.bf16.msra.mxu0 0
        %623 = vmatprep.subr.bf16.mxu0 0
        %624 = vmatpush1.bf16.msra.mxu0 0
        %625 = vmatprep.subr.bf16.mxu0 0
        %626 = vmatpush1.bf16.msra.mxu0 0
        %627 = vmatprep.subr.bf16.mxu0 0
        %628 = vmatpush1.bf16.msra.mxu0 0
        %629 = vmatprep.subr.bf16.mxu0 0
        %630 = vmatpush1.bf16.msra.mxu0 0
        %631 = vmatprep.subr.bf16.mxu0 0
        %632 = vmatpush1.bf16.msra.mxu0 0
        %633 = vmatprep.subr.bf16.mxu0 0
        %634 = vmatpush1.bf16.msra.mxu0 0
        %635 = vmatprep.subr.bf16.mxu0 0
        %636 = vmatpush1.bf16.msra.mxu0 0
        %637 = vmatprep.subr.bf16.mxu0 0
        %638 = vmatpush1.bf16.msra.mxu0 0
        %639 = vmatprep.subr.bf16.mxu0 0
        %640 = vmatpush1.bf16.msra.mxu0 0
        %641 = vmatprep.subr.bf16.mxu0 0
        %642 = vmatpush1.bf16.msra.mxu0 0
        %643 = vmatprep.subr.bf16.mxu0 0
        %644 = vmatpush1.bf16.msra.mxu0 0
        %645 = vmatprep.subr.bf16.mxu0 0
        %646 = vmatpush1.bf16.msra.mxu0 0
        %647 = vmatprep.subr.bf16.mxu0 0
        %648 = vmatpush1.bf16.msra.mxu0 0
        %649 = vmatprep.subr.bf16.mxu0 0
        %650 = vmatpush1.bf16.msra.mxu0 0
        %651 = vmatprep.mubr.bf16.mxu0 0
        %652 = vmatmul.mubr.bf16.gmra.mrb[0].mxu0 %v614
        %v653 = vpop.f32.mrb[0].mxu0
        %v654 = vadd.f32 0.0, %v653
        %v655 = vpop.f32.mrb[0].mxu0
        %v656 = vpop.f32.mrb[0].mxu0
        %v657 = vpop.f32.mrb[0].mxu0
        %658 = vdwg.mxu0
        %v660 = vsel %vm283, %v519, 0
        %v663 = vsel %vm523, %v282, 0
        %665 = vmatprep.subr.bf16.mxu0 0
        %666 = vmatpush1.bf16.msra.mxu0 %v663
        %667 = vmatprep.subr.bf16.mxu0 0
        %668 = vmatpush1.bf16.msra.mxu0 0
        %669 = vmatprep.subr.bf16.mxu0 0
        %670 = vmatpush1.bf16.msra.mxu0 0
        %671 = vmatprep.subr.bf16.mxu0 0
        %672 = vmatpush1.bf16.msra.mxu0 0
        %673 = vmatprep.subr.bf16.mxu0 0
        %674 = vmatpush1.bf16.msra.mxu0 0
        %675 = vmatprep.subr.bf16.mxu0 0
        %676 = vmatpush1.bf16.msra.mxu0 0
        %677 = vmatprep.subr.bf16.mxu0 0
        %678 = vmatpush1.bf16.msra.mxu0 0
        %679 = vmatprep.subr.bf16.mxu0 0
        %680 = vmatpush1.bf16.msra.mxu0 0
        %681 = vmatprep.subr.bf16.mxu0 0
        %682 = vmatpush1.bf16.msra.mxu0 0
        %683 = vmatprep.subr.bf16.mxu0 0
        %684 = vmatpush1.bf16.msra.mxu0 0
        %685 = vmatprep.subr.bf16.mxu0 0
        %686 = vmatpush1.bf16.msra.mxu0 0
        %687 = vmatprep.subr.bf16.mxu0 0
        %688 = vmatpush1.bf16.msra.mxu0 0
        %689 = vmatprep.subr.bf16.mxu0 0
        %690 = vmatpush1.bf16.msra.mxu0 0
        %691 = vmatprep.subr.bf16.mxu0 0
        %692 = vmatpush1.bf16.msra.mxu0 0
        %693 = vmatprep.subr.bf16.mxu0 0
        %694 = vmatpush1.bf16.msra.mxu0 0
        %695 = vmatprep.subr.bf16.mxu0 0
        %696 = vmatpush1.bf16.msra.mxu0 0
        %697 = vmatprep.mubr.bf16.mxu0 0
        %698 = vmatmul.mubr.bf16.gmra.mrb[0].mxu0 %v660
        %v699 = vpop.f32.mrb[0].mxu0
        %v700 = vadd.f32 0.0, %v699
        %v701 = vpop.f32.mrb[0].mxu0
        %v702 = vpop.f32.mrb[0].mxu0
        %v703 = vpop.f32.mrb[0].mxu0
        %704 = vdwg.mxu0
        %v705 = vpack.c.bf16 %v562, %v562
        %v706 = vpack.c.bf16 %v608, %v608
        %v707 = vpack.c.bf16 %v654, %v654
        %v708 = vpack.c.bf16 %v700, %v700
        %vm709 = vcmask 60416
        %710 = vst.msk [vmem:[%s265] sm:$0xf] %vm709, %v705
        %711 = vst.msk [vmem:[%s265 + $0x4] sm:$0xf] %vm709, %v706
        %712 = vst.msk [vmem:[%s265 + $0x8] sm:$0xf] %vm709, %v707
        %713 = vst.msk [vmem:[%s265 + $0xc] sm:$0xf] %vm709, %v708
        %s714 = sand.u32 %s109, 1
        %s715 = scalar_lea.sflag [#allocation4], %s714
        %s716 = sand.u32 %s109, 1
        %s717 = smul.addr %s716, 16
        %s718 = scalar_lea.vmem [#allocation8], %s717
        // Predicated region
        $region45: #{transformer_forward.11} parent=31 // pred_check
          %p719 = pneg %p119
        $region46: #{transformer_forward.11} parent=31 // pred_check_branch
          %721 = sbr.rel (%p719) target = $region48
        $region47: #{transformer_forward.11} parent=31 // pred_region
          %s722 = smul.u32 4, %s23
          %s724 = ssub.s32 256, 256
          %725 = vsyncadd %s715, %s724
          %s726 = smul.addr %s722, 64
          %s727 = scalar_lea.hbm %s3, %s726
          %s728 = sshll.u32 %s718, 4
          %s729 = int_to_ptr.vmem [resolvable:$true] %s728
          %734 = dma.vmem_to_hbm [thread:$0]  %s729, 256, %s727, %s715, 64, 64, 4
        $region48: #{transformer_forward.11} parent=31 // pred_fallthru
          _
      $region32: #{transformer_forward.11} parent=5 // pred_fallthru
        _
      %p735 = scmp.le.s32.totalorder 2, %s18
      // Predicated region
      $region49: #{transformer_forward.11} parent=5 // pred_check
        %p736 = pneg %p735
      $region50: #{transformer_forward.11} parent=5 // pred_check_branch
        %738 = sbr.rel (%p736) target = $region52
      $region51: #{transformer_forward.11} parent=5 // pred_region
        %s739 = ssub.s32 %s18, 2
        // Predicated region
        $region53: #{transformer_forward.11} parent=51 // pred_check
          %p740 = pneg %p125
        $region54: #{transformer_forward.11} parent=51 // pred_check_branch
          %742 = sbr.rel (%p740) target = $region56
        $region55: #{transformer_forward.11} parent=51 // pred_region
          %s743 = sand.u32 %s110, 1
          %s744 = scalar_lea.sflag [#allocation4], %s743
          %s745 = sand.u32 %s110, 1
          %s746 = smul.addr %s745, 16
          %s747 = scalar_lea.vmem [#allocation8], %s746
          %748 = dma.done %s744, 256
        $region56: #{transformer_forward.11} parent=51 // pred_fallthru
          _
      $region52: #{transformer_forward.11} parent=5 // pred_fallthru
        _
    $region6: #{transformer_forward.11} parent=1 // loop_footer
      %s22 = sadd.s32 1, %s18
    $region7: #{transformer_forward.11} parent=1 // loop_footer_branch
      %17 = sbr.rel target = $region3
    $region8: #{transformer_forward.11} parent=1 // loop_exit
      _
    %749 = vsyncpa [#allocation3], 1
    %s750 = scalar_lea.sflag [#allocation3], 1
    %751 = vsyncpa %s750, 1
    %752 = vsyncpa [#allocation6], 1
    %s753 = scalar_lea.sflag [#allocation6], 1
    %754 = vsyncpa %s753, 1
    %755 = vsyncpa [#allocation4], 1
    %s756 = scalar_lea.sflag [#allocation4], 1
    %757 = vsyncpa %s756, 1

// kernel: transformer_forward.13
$region0: #{transformer_forward.13}
  #allocation0 [shape = 'u32[]', space=smem, size = 0x4, offset = 0x4, fixed_abs, tag = 'smem constant byte address 0x4 - core index']
  #allocation1 [shape = 'u32[144,128]{1,0:T(1,128)}', space=vmem, size = 0x12000, scoped, tag = 'internal scratch']
  %s0 = inlined_call_operand.hbm [shape: bf16[16,32], index: 0, kind: input, shape index: {}]
  %s1 = inlined_call_operand.hbm [shape: f32[1,32], index: 1, kind: input, shape index: {}]
  %s2 = inlined_call_operand.hbm [shape: f32[1,32], index: 2, kind: input, shape index: {}]
  %s3 = inlined_call_operand.hbm [shape: bf16[32,128], index: 3, kind: input, shape index: {}]
  %s4 = inlined_call_operand.hbm [shape: f32[1,128], index: 4, kind: input, shape index: {}]
  %s5 = inlined_call_operand.hbm [shape: bf16[16,128], index: 5, kind: output, shape index: {}]
  %s6 = sld [smem:[#allocation0]]
  $region50: #{transformer_forward.13} parent=0
    _
  %s8 = ssub.s32 1, %s6
  %s9 = scalar_select 0, %s8, %s6
  $region1: #{transformer_forward.13} parent=0
    #allocation2 [shape = 'u8[4096]{0}', space=vmem, size = 0x1000, scoped, tag = 'input window, operand 0, single buffered']
    #allocation3 [shape = 's32[1]{0}', space=sflag, size = 0x4, scoped, tag = 'scoped memory for transformer_forward.13']
    #allocation4 [shape = 's32[1]{0}', space=sflag, size = 0x4, scoped, tag = 'scoped memory for transformer_forward.13']
    #allocation5 [shape = 'u8[512]{0}', space=vmem, size = 0x400, scoped, tag = 'input window, operand 1, single buffered']
    #allocation6 [shape = 's32[1]{0}', space=sflag, size = 0x4, scoped, tag = 'scoped memory for transformer_forward.13']
    #allocation7 [shape = 'u8[512]{0}', space=vmem, size = 0x400, scoped, tag = 'input window, operand 2, single buffered']
    #allocation8 [shape = 'u8[8192]{0}', space=vmem, size = 0x2000, scoped, tag = 'input window, operand 3, single buffered']
    #allocation9 [shape = 's32[1]{0}', space=sflag, size = 0x4, scoped, tag = 'scoped memory for transformer_forward.13']
    #allocation10 [shape = 'u8[512]{0}', space=vmem, size = 0x400, scoped, tag = 'input window, operand 4, single buffered']
    #allocation11 [shape = 'u8[4096]{0}', space=vmem, size = 0x1000, scoped, tag = 'output window, operand 0, single buffered']
    %10 = vsyncpa [#allocation3], 0
    %11 = vsyncpa [#allocation6], 0
    %12 = vsyncpa [#allocation9], 0
    %13 = vsyncpa [#allocation4], 0
    // Predicated region
    $region2: #{transformer_forward.13} parent=1 // pred_check
      _
    $region3: #{transformer_forward.13} parent=1 // pred_check_branch
      %15 = sbr.rel (0) target = $region5
    $region4: #{transformer_forward.13} parent=1 // pred_region
      %s17 = ssub.s32 128, 128
      %18 = vsyncadd [#allocation3], %s17
      %s19 = sshll.u32 [#allocation2], 4
      %s20 = int_to_ptr.vmem [resolvable:$true] %s19
      %25 = dma.hbm_to_vmem [thread:$0]  %s0, 128, %s20, [#allocation3], 64, 64, 4
    $region5: #{transformer_forward.13} parent=1 // pred_fallthru
      _
    // Predicated region
    $region6: #{transformer_forward.13} parent=1 // pred_check
      _
    $region7: #{transformer_forward.13} parent=1 // pred_check_branch
      %27 = sbr.rel (0) target = $region9
    $region8: #{transformer_forward.13} parent=1 // pred_region
      %s29 = ssub.s32 16, 16
      %30 = vsyncadd [#allocation6], %s29
      %s32 = sshll.u32 [#allocation5], 4
      %s33 = int_to_ptr.vmem [resolvable:$true] %s32
      %35 = dma.hbm_to_vmem [thread:$0]  %s1, 16, %s33, [#allocation6]
    $region9: #{transformer_forward.13} parent=1 // pred_fallthru
      _
    // Predicated region
    $region10: #{transformer_forward.13} parent=1 // pred_check
      _
    $region11: #{transformer_forward.13} parent=1 // pred_check_branch
      %37 = sbr.rel (0) target = $region13
    $region12: #{transformer_forward.13} parent=1 // pred_region
      %s39 = ssub.s32 16, 16
      %40 = vsyncadd [#allocation6], %s39
      %s42 = sshll.u32 [#allocation7], 4
      %s43 = int_to_ptr.vmem [resolvable:$true] %s42
      %45 = dma.hbm_to_vmem [thread:$0]  %s2, 16, %s43, [#allocation6]
    $region13: #{transformer_forward.13} parent=1 // pred_fallthru
      _
    // Predicated region
    $region14: #{transformer_forward.13} parent=1 // pred_check
      _
    $region15: #{transformer_forward.13} parent=1 // pred_check_branch
      %47 = sbr.rel (0) target = $region17
    $region16: #{transformer_forward.13} parent=1 // pred_region
      %s49 = ssub.s32 256, 256
      %50 = vsyncadd [#allocation9], %s49
      %s51 = sshll.u32 [#allocation8], 4
      %s52 = int_to_ptr.vmem [resolvable:$true] %s51
      %57 = dma.hbm_to_vmem [thread:$0]  %s3, 256, %s52, [#allocation9], 64, 64, 4
    $region17: #{transformer_forward.13} parent=1 // pred_fallthru
      _
    // Predicated region
    $region18: #{transformer_forward.13} parent=1 // pred_check
      _
    $region19: #{transformer_forward.13} parent=1 // pred_check_branch
      %59 = sbr.rel (0) target = $region21
    $region20: #{transformer_forward.13} parent=1 // pred_region
      %s61 = ssub.s32 16, 16
      %62 = vsyncadd [#allocation9], %s61
      %s64 = sshll.u32 [#allocation10], 4
      %s65 = int_to_ptr.vmem [resolvable:$true] %s64
      %67 = dma.hbm_to_vmem [thread:$0]  %s4, 16, %s65, [#allocation9]
    $region21: #{transformer_forward.13} parent=1 // pred_fallthru
      _
    // Predicated region
    $region22: #{transformer_forward.13} parent=1 // pred_check
      _
    $region23: #{transformer_forward.13} parent=1 // pred_check_branch
      %69 = sbr.rel (0) target = $region25
    $region24: #{transformer_forward.13} parent=1 // pred_region
      %70 = dma.done [#allocation3], 128
    $region25: #{transformer_forward.13} parent=1 // pred_fallthru
      _
    // Predicated region
    $region26: #{transformer_forward.13} parent=1 // pred_check
      _
    $region27: #{transformer_forward.13} parent=1 // pred_check_branch
      %72 = sbr.rel (0) target = $region29
    $region28: #{transformer_forward.13} parent=1 // pred_region
      %73 = dma.done [#allocation6], 16
    $region29: #{transformer_forward.13} parent=1 // pred_fallthru
      _
    // Predicated region
    $region30: #{transformer_forward.13} parent=1 // pred_check
      _
    $region31: #{transformer_forward.13} parent=1 // pred_check_branch
      %75 = sbr.rel (0) target = $region33
    $region32: #{transformer_forward.13} parent=1 // pred_region
      %76 = dma.done [#allocation6], 16
    $region33: #{transformer_forward.13} parent=1 // pred_fallthru
      _
    // Predicated region
    $region34: #{transformer_forward.13} parent=1 // pred_check
      _
    $region35: #{transformer_forward.13} parent=1 // pred_check_branch
      %78 = sbr.rel (0) target = $region37
    $region36: #{transformer_forward.13} parent=1 // pred_region
      %79 = dma.done [#allocation9], 256
    $region37: #{transformer_forward.13} parent=1 // pred_fallthru
      _
    // Predicated region
    $region38: #{transformer_forward.13} parent=1 // pred_check
      _
    $region39: #{transformer_forward.13} parent=1 // pred_check_branch
      %81 = sbr.rel (0) target = $region41
    $region40: #{transformer_forward.13} parent=1 // pred_region
      %82 = dma.done [#allocation9], 16
    $region41: #{transformer_forward.13} parent=1 // pred_fallthru
      _
    %v84 = vld [vmem:[#allocation2] sm:$0xf]
    %v85 = vld [vmem:[#allocation2 + $0x4] sm:$0xf]
    %v86 = vunpack.c.l.bf16 %v84
    %v87 = vunpack.c.l.bf16 %v85
    %vm88 = vcmask 261120
    %v89 = vsel %vm88, %v86, 0.0
    %90 = vadd.xlane.f32.xlu0 %v89
    %v91 = vpop.xlane.xlu0 %90
    %v92 = vsel %vm88, %v87, 0.0
    %93 = vadd.xlane.f32.xlu0 %v92
    %v94 = vpop.xlane.xlu0 %93
    %v95 = vrcp.pop 32.0
    %v96 = vmul.f32 %v91, %v95
    %v97 = vmul.f32 %v94, %v95
    %v98 = vsub.f32 %v86, %v96
    %v99 = vsub.f32 %v87, %v97
    %v100 = vmul.f32 %v98, %v98
    %v101 = vmul.f32 %v99, %v99
    %v102 = vsel %vm88, %v100, 0.0
    %103 = vadd.xlane.f32.xlu0 %v102
    %v104 = vpop.xlane.xlu0 %103
    %v105 = vsel %vm88, %v101, 0.0
    %106 = vadd.xlane.f32.xlu0 %v105
    %v107 = vpop.xlane.xlu0 %106
    %v108 = vmul.f32 %v104, %v95
    %v109 = vmul.f32 %v107, %v95
    %v110 = vadd.f32 %v108, 1e-05
    %v111 = vadd.f32 %v109, 1e-05
    %v112 = vrsqrt.pop %v110
    %v113 = vrsqrt.pop %v111
    %v114 = vmul.f32 %v98, %v112
    %v115 = vmul.f32 %v99, %v113
    %v116 = vld [vmem:[#allocation5] sm:$0x1]
    %v118 = vlaneseq
    %v119 = vshrl.u32 %v118, 7
    %v120 = vsub.s32 0, %v119
    %v121 = vrot.slane %v116, %v120
    %v123 = vmul.f32 %v114, %v121
    %v124 = vmul.f32 %v115, %v121
    %v125 = vld [vmem:[#allocation7] sm:$0x1]
    %v127 = vlaneseq
    %v128 = vshrl.u32 %v127, 7
    %v129 = vsub.s32 0, %v128
    %v130 = vrot.slane %v125, %v129
    %v132 = vadd.f32 %v123, %v130
    %v133 = vadd.f32 %v124, %v130
    %v134 = vpack.c.bf16 %v133, %v132
    %v135 = vld [vmem:[#allocation8] sm:$0xf]
    %v136 = vld [vmem:[#allocation8 + $0x4] sm:$0xf]
    %v137 = vld [vmem:[#allocation8 + $0x8] sm:$0xf]
    %v138 = vld [vmem:[#allocation8 + $0xc] sm:$0xf]
    %v139 = vld [vmem:[#allocation10] sm:$0x1]
    %v141 = vlaneseq
    %v142 = vshrl.u32 %v141, 7
    %v143 = vsub.s32 0, %v142
    %v144 = vrot.slane %v139, %v143
    %v150 = vunpack.c.l.b16 %v135
    %v151 = vunpack.c.l.b16 %v136
    %v152 = vunpack.c.l.b16 %v137
    %v153 = vunpack.c.l.b16 %v138
    %v154 = vpack.c.b16 %v151, %v150
    %v155 = vpack.c.b16 %v153, %v152
    %v159 = vsel %vm88, %v134, 0
    %161 = vmatprep.subr.bf16.mxu0 0
    %162 = vmatpush1.bf16.msra.mxu0 %v154
    %163 = vmatprep.subr.bf16.mxu0 0
    %164 = vmatpush1.bf16.msra.mxu0 %v155
    %165 = vmatprep.subr.bf16.mxu0 0
    %166 = vmatpush1.bf16.msra.mxu0 0
    %167 = vmatprep.subr.bf16.mxu0 0
    %168 = vmatpush1.bf16.msra.mxu0 0
    %169 = vmatprep.subr.bf16.mxu0 0
    %170 = vmatpush1.bf16.msra.mxu0 0
    %171 = vmatprep.subr.bf16.mxu0 0
    %172 = vmatpush1.bf16.msra.mxu0 0
    %173 = vmatprep.subr.bf16.mxu0 0
    %174 = vmatpush1.bf16.msra.mxu0 0
    %175 = vmatprep.subr.bf16.mxu0 0
    %176 = vmatpush1.bf16.msra.mxu0 0
    %177 = vmatprep.subr.bf16.mxu0 0
    %178 = vmatpush1.bf16.msra.mxu0 0
    %179 = vmatprep.subr.bf16.mxu0 0
    %180 = vmatpush1.bf16.msra.mxu0 0
    %181 = vmatprep.subr.bf16.mxu0 0
    %182 = vmatpush1.bf16.msra.mxu0 0
    %183 = vmatprep.subr.bf16.mxu0 0
    %184 = vmatpush1.bf16.msra.mxu0 0
    %185 = vmatprep.subr.bf16.mxu0 0
    %186 = vmatpush1.bf16.msra.mxu0 0
    %187 = vmatprep.subr.bf16.mxu0 0
    %188 = vmatpush1.bf16.msra.mxu0 0
    %189 = vmatprep.subr.bf16.mxu0 0
    %190 = vmatpush1.bf16.msra.mxu0 0
    %191 = vmatprep.subr.bf16.mxu0 0
    %192 = vmatpush1.bf16.msra.mxu0 0
    %193 = vmatprep.mubr.bf16.mxu0 0
    %194 = vmatmul.mubr.bf16.gmra.mrb[0].mxu0 %v159
    %v195 = vpop.f32.mrb[0].mxu0
    %v196 = vadd.f32 %v144, %v195
    %v197 = vpop.f32.mrb[0].mxu0
    %v198 = vpop.f32.mrb[0].mxu0
    %v199 = vadd.f32 %v144, %v198
    %v200 = vpop.f32.mrb[0].mxu0
    %201 = vdwg.mxu0
    %v202 = vmul.f32 %v196, 1.702
    %v203 = vmul.f32 %v199, 1.702
    %v204 = vxor.u32 %v202, 2147483648
    %v205 = vxor.u32 %v203, 2147483648
    %v206 = vmul.f32 %v204, 1.442695
    %v207 = vpow.pop %v206
    %v208 = vmul.f32 %v205, 1.442695
    %v209 = vpow.pop %v208
    %v210 = vadd.f32 %v207, 1.0
    %v211 = vadd.f32 %v209, 1.0
    %v212 = vrcp.pop %v210
    %v213 = vmul.f32 1.0, %v212
    %v214 = vrcp.pop %v211
    %v215 = vmul.f32 1.0, %v214
    %v216 = vmul.f32 %v196, %v213
    %v217 = vmul.f32 %v199, %v215
    %v218 = vpack.c.bf16 %v217, %v216
    %v220 = vunpack.c.l.b16 %v218
    %v221 = vunpack.c.h.b16 %v218
    %v222 = vpack.c.b16 %v220, %v220
    %v223 = vpack.c.b16 %v221, %v221
    %226 = vst [vmem:[#allocation11] sm:$0xf] %v222
    %227 = vst [vmem:[#allocation11 + $0x4] sm:$0xf] %v223
    // Predicated region
    $region42: #{transformer_forward.13} parent=1 // pred_check
      _
    $region43: #{transformer_forward.13} parent=1 // pred_check_branch
      %229 = sbr.rel (0) target = $region45
    $region44: #{transformer_forward.13} parent=1 // pred_region
      %s231 = ssub.s32 128, 128
      %232 = vsyncadd [#allocation4], %s231
      %s233 = sshll.u32 [#allocation11], 4
      %s234 = int_to_ptr.vmem [resolvable:$true] %s233
      %239 = dma.vmem_to_hbm [thread:$0]  %s234, 128, %s5, [#allocation4], 64, 64, 4
    $region45: #{transformer_forward.13} parent=1 // pred_fallthru
      _
    // Predicated region
    $region46: #{transformer_forward.13} parent=1 // pred_check
      _
    $region47: #{transformer_forward.13} parent=1 // pred_check_branch
      %241 = sbr.rel (0) target = $region49
    $region48: #{transformer_forward.13} parent=1 // pred_region
      %242 = dma.done [#allocation4], 128
    $region49: #{transformer_forward.13} parent=1 // pred_fallthru
      _
    %243 = vsyncpa [#allocation3], 1
    %244 = vsyncpa [#allocation6], 1
    %245 = vsyncpa [#allocation9], 1
    %246 = vsyncpa [#allocation4], 1

// kernel: transformer_forward.12
$region0: #{transformer_forward.12}
  #allocation0 [shape = 'u32[]', space=smem, size = 0x4, offset = 0x4, fixed_abs, tag = 'smem constant byte address 0x4 - core index']
  #allocation1 [shape = 'u32[144,128]{1,0:T(1,128)}', space=vmem, size = 0x12000, scoped, tag = 'internal scratch']
  #allocation2 [shape = 'f32[16,32]{1,0:T(8,128)}', space=vmem, size = 0x2000, scoped, tag = 'scratch operand']
  %s0 = inlined_call_operand.hbm [shape: bf16[16,32], index: 0, kind: input, shape index: {}]
  %s1 = inlined_call_operand.hbm [shape: bf16[32,32], index: 1, kind: input, shape index: {}]
  %s2 = inlined_call_operand.hbm [shape: f32[1,32], index: 2, kind: input, shape index: {}]
  %s3 = inlined_call_operand.hbm [shape: bf16[16,32], index: 3, kind: input, shape index: {}]
  %s4 = inlined_call_operand.hbm [shape: bf16[16,32], index: 4, kind: output, shape index: {}]
  %s5 = sld [smem:[#allocation0]]
  $region50: #{transformer_forward.12} parent=0
    _
  %s7 = ssub.s32 1, %s5
  %s8 = scalar_select 0, %s7, %s5
  $region1: #{transformer_forward.12} parent=0
    #allocation3 [shape = 'u8[4096]{0}', space=vmem, size = 0x1000, scoped, tag = 'input window, operand 0, single buffered']
    #allocation4 [shape = 's32[1]{0}', space=sflag, size = 0x4, scoped, tag = 'scoped memory for transformer_forward.12']
    #allocation5 [shape = 's32[1]{0}', space=sflag, size = 0x4, scoped, tag = 'scoped memory for transformer_forward.12']
    #allocation6 [shape = 'u8[8192]{0}', space=vmem, size = 0x2000, scoped, tag = 'input window, operand 1, single buffered']
    #allocation7 [shape = 's32[1]{0}', space=sflag, size = 0x4, scoped, tag = 'scoped memory for transformer_forward.12']
    #allocation8 [shape = 'u8[512]{0}', space=vmem, size = 0x400, scoped, tag = 'input window, operand 2, single buffered']
    #allocation9 [shape = 'u8[4096]{0}', space=vmem, size = 0x1000, scoped, tag = 'input window, operand 3, single buffered']
    #allocation10 [shape = 's32[1]{0}', space=sflag, size = 0x4, scoped, tag = 'scoped memory for transformer_forward.12']
    #allocation11 [shape = 'u8[4096]{0}', space=vmem, size = 0x1000, scoped, tag = 'output window, operand 0, single buffered']
    %9 = vsyncpa [#allocation4], 0
    %10 = vsyncpa [#allocation7], 0
    %11 = vsyncpa [#allocation10], 0
    %12 = vsyncpa [#allocation5], 0
    // Predicated region
    $region2: #{transformer_forward.12} parent=1 // pred_check
      _
    $region3: #{transformer_forward.12} parent=1 // pred_check_branch
      %14 = sbr.rel (0) target = $region5
    $region4: #{transformer_forward.12} parent=1 // pred_region
      %s16 = ssub.s32 128, 128
      %17 = vsyncadd [#allocation4], %s16
      %s18 = sshll.u32 [#allocation3], 4
      %s19 = int_to_ptr.vmem [resolvable:$true] %s18
      %24 = dma.hbm_to_vmem [thread:$0]  %s0, 128, %s19, [#allocation4], 64, 64, 4
    $region5: #{transformer_forward.12} parent=1 // pred_fallthru
      _
    // Predicated region
    $region6: #{transformer_forward.12} parent=1 // pred_check
      _
    $region7: #{transformer_forward.12} parent=1 // pred_check_branch
      %26 = sbr.rel (0) target = $region9
    $region8: #{transformer_forward.12} parent=1 // pred_region
      %s28 = ssub.s32 256, 256
      %29 = vsyncadd [#allocation7], %s28
      %s30 = sshll.u32 [#allocation6], 4
      %s31 = int_to_ptr.vmem [resolvable:$true] %s30
      %36 = dma.hbm_to_vmem [thread:$0]  %s1, 256, %s31, [#allocation7], 64, 64, 4
    $region9: #{transformer_forward.12} parent=1 // pred_fallthru
      _
    // Predicated region
    $region10: #{transformer_forward.12} parent=1 // pred_check
      _
    $region11: #{transformer_forward.12} parent=1 // pred_check_branch
      %38 = sbr.rel (0) target = $region13
    $region12: #{transformer_forward.12} parent=1 // pred_region
      %s40 = ssub.s32 16, 16
      %41 = vsyncadd [#allocation7], %s40
      %s43 = sshll.u32 [#allocation8], 4
      %s44 = int_to_ptr.vmem [resolvable:$true] %s43
      %46 = dma.hbm_to_vmem [thread:$0]  %s2, 16, %s44, [#allocation7]
    $region13: #{transformer_forward.12} parent=1 // pred_fallthru
      _
    // Predicated region
    $region14: #{transformer_forward.12} parent=1 // pred_check
      _
    $region15: #{transformer_forward.12} parent=1 // pred_check_branch
      %48 = sbr.rel (0) target = $region17
    $region16: #{transformer_forward.12} parent=1 // pred_region
      %s50 = ssub.s32 128, 128
      %51 = vsyncadd [#allocation10], %s50
      %s52 = sshll.u32 [#allocation9], 4
      %s53 = int_to_ptr.vmem [resolvable:$true] %s52
      %58 = dma.hbm_to_vmem [thread:$0]  %s3, 128, %s53, [#allocation10], 64, 64, 4
    $region17: #{transformer_forward.12} parent=1 // pred_fallthru
      _
    // Predicated region
    $region18: #{transformer_forward.12} parent=1 // pred_check
      _
    $region19: #{transformer_forward.12} parent=1 // pred_check_branch
      %60 = sbr.rel (0) target = $region21
    $region20: #{transformer_forward.12} parent=1 // pred_region
      %61 = dma.done [#allocation4], 128
    $region21: #{transformer_forward.12} parent=1 // pred_fallthru
      _
    // Predicated region
    $region22: #{transformer_forward.12} parent=1 // pred_check
      _
    $region23: #{transformer_forward.12} parent=1 // pred_check_branch
      %63 = sbr.rel (0) target = $region25
    $region24: #{transformer_forward.12} parent=1 // pred_region
      %64 = dma.done [#allocation7], 256
    $region25: #{transformer_forward.12} parent=1 // pred_fallthru
      _
    // Predicated region
    $region26: #{transformer_forward.12} parent=1 // pred_check
      _
    $region27: #{transformer_forward.12} parent=1 // pred_check_branch
      %66 = sbr.rel (0) target = $region29
    $region28: #{transformer_forward.12} parent=1 // pred_region
      %67 = dma.done [#allocation7], 16
    $region29: #{transformer_forward.12} parent=1 // pred_fallthru
      _
    // Predicated region
    $region30: #{transformer_forward.12} parent=1 // pred_check
      _
    $region31: #{transformer_forward.12} parent=1 // pred_check_branch
      %69 = sbr.rel (0) target = $region33
    $region32: #{transformer_forward.12} parent=1 // pred_region
      %70 = dma.done [#allocation10], 128
    $region33: #{transformer_forward.12} parent=1 // pred_fallthru
      _
    %p72 = scmp.eq.s32.totalorder 0, 0
    // Predicated region
    $region34: #{transformer_forward.12} parent=1 // pred_check
      %p73 = pneg %p72
    $region35: #{transformer_forward.12} parent=1 // pred_check_branch
      %75 = sbr.rel (%p73) target = $region37
    $region36: #{transformer_forward.12} parent=1 // pred_region
      %vm76 = vcmask 261120
      %77 = vst.msk [vmem:[#allocation2] sm:$0xff] %vm76, 0.0
      %78 = vst.msk [vmem:[#allocation2 + $0x8] sm:$0xff] %vm76, 0.0
    $region37: #{transformer_forward.12} parent=1 // pred_fallthru
      _
    %v79 = vld [vmem:[#allocation2] sm:$0xff]
    %v80 = vld [vmem:[#allocation2 + $0x8] sm:$0xff]
    %v81 = vld [vmem:[#allocation3] sm:$0xf]
    %v82 = vld [vmem:[#allocation3 + $0x4] sm:$0xf]
    %v83 = vld [vmem:[#allocation6] sm:$0xf]
    %v84 = vld [vmem:[#allocation6 + $0x4] sm:$0xf]
    %v85 = vld [vmem:[#allocation6 + $0x8] sm:$0xf]
    %v86 = vld [vmem:[#allocation6 + $0xc] sm:$0xf]
    %v89 = vunpack.c.l.b16 %v81
    %v90 = vunpack.c.l.b16 %v82
    %v91 = vpack.c.b16 %v90, %v89
    %v96 = vunpack.c.l.b16 %v83
    %v97 = vunpack.c.l.b16 %v84
    %v98 = vunpack.c.l.b16 %v85
    %v99 = vunpack.c.l.b16 %v86
    %v100 = vpack.c.b16 %v97, %v96
    %v101 = vpack.c.b16 %v99, %v98
    %vm104 = vcmask 261120
    %v106 = vsel %vm104, %v91, 0
    %108 = vmatprep.subr.bf16.mxu0 0
    %109 = vmatpush1.bf16.msra.mxu0 %v100
    %110 = vmatprep.subr.bf16.mxu0 0
    %111 = vmatpush1.bf16.msra.mxu0 %v101
    %112 = vmatprep.subr.bf16.mxu0 0
    %113 = vmatpush1.bf16.msra.mxu0 0
    %114 = vmatprep.subr.bf16.mxu0 0
    %115 = vmatpush1.bf16.msra.mxu0 0
    %116 = vmatprep.subr.bf16.mxu0 0
    %117 = vmatpush1.bf16.msra.mxu0 0
    %118 = vmatprep.subr.bf16.mxu0 0
    %119 = vmatpush1.bf16.msra.mxu0 0
    %120 = vmatprep.subr.bf16.mxu0 0
    %121 = vmatpush1.bf16.msra.mxu0 0
    %122 = vmatprep.subr.bf16.mxu0 0
    %123 = vmatpush1.bf16.msra.mxu0 0
    %124 = vmatprep.subr.bf16.mxu0 0
    %125 = vmatpush1.bf16.msra.mxu0 0
    %126 = vmatprep.subr.bf16.mxu0 0
    %127 = vmatpush1.bf16.msra.mxu0 0
    %128 = vmatprep.subr.bf16.mxu0 0
    %129 = vmatpush1.bf16.msra.mxu0 0
    %130 = vmatprep.subr.bf16.mxu0 0
    %131 = vmatpush1.bf16.msra.mxu0 0
    %132 = vmatprep.subr.bf16.mxu0 0
    %133 = vmatpush1.bf16.msra.mxu0 0
    %134 = vmatprep.subr.bf16.mxu0 0
    %135 = vmatpush1.bf16.msra.mxu0 0
    %136 = vmatprep.subr.bf16.mxu0 0
    %137 = vmatpush1.bf16.msra.mxu0 0
    %138 = vmatprep.subr.bf16.mxu0 0
    %139 = vmatpush1.bf16.msra.mxu0 0
    %140 = vmatprep.mubr.bf16.mxu0 0
    %141 = vmatmul.mubr.bf16.gmra.mrb[0].mxu0 %v106
    %v142 = vpop.f32.mrb[0].mxu0
    %v143 = vadd.f32 0.0, %v142
    %v144 = vpop.f32.mrb[0].mxu0
    %v145 = vpop.f32.mrb[0].mxu0
    %v146 = vadd.f32 0.0, %v145
    %v147 = vpop.f32.mrb[0].mxu0
    %148 = vdwg.mxu0
    %v149 = vadd.f32 %v79, %v143
    %v150 = vadd.f32 %v80, %v146
    %151 = vst.msk [vmem:[#allocation2] sm:$0xff] %vm104, %v149
    %152 = vst.msk [vmem:[#allocation2 + $0x8] sm:$0xff] %vm104, %v150
    // Predicated region
    $region38: #{transformer_forward.12} parent=1 // pred_check
      %p153 = pneg %p72
    $region39: #{transformer_forward.12} parent=1 // pred_check_branch
      %155 = sbr.rel (%p153) target = $region41
    $region40: #{transformer_forward.12} parent=1 // pred_region
      %v156 = vld [vmem:[#allocation2] sm:$0xff]
      %v157 = vld [vmem:[#allocation2 + $0x8] sm:$0xff]
      %v158 = vld [vmem:[#allocation8] sm:$0x1]
      %v160 = vlaneseq
      %v161 = vshrl.u32 %v160, 7
      %v162 = vsub.s32 0, %v161
      %v163 = vrot.slane %v158, %v162
      %v165 = vadd.f32 %v156, %v163
      %v166 = vadd.f32 %v157, %v163
      %v167 = vld [vmem:[#allocation9] sm:$0xf]
      %v168 = vld [vmem:[#allocation9 + $0x4] sm:$0xf]
      %v169 = vunpack.c.l.bf16 %v167
      %v170 = vunpack.c.l.bf16 %v168
      %v171 = vadd.f32 %v165, %v169
      %v172 = vadd.f32 %v166, %v170
      %v173 = vpack.c.bf16 %v172, %v171
      %v175 = vunpack.c.l.b16 %v173
      %v176 = vunpack.c.h.b16 %v173
      %v177 = vpack.c.b16 %v175, %v175
      %v178 = vpack.c.b16 %v176, %v176
      %vm181 = vcmask 257024
      %182 = vst.msk [vmem:[#allocation11] sm:$0xf] %vm181, %v177
      %183 = vst.msk [vmem:[#allocation11 + $0x4] sm:$0xf] %vm181, %v178
    $region41: #{transformer_forward.12} parent=1 // pred_fallthru
      _
    // Predicated region
    $region42: #{transformer_forward.12} parent=1 // pred_check
      _
    $region43: #{transformer_forward.12} parent=1 // pred_check_branch
      %185 = sbr.rel (0) target = $region45
    $region44: #{transformer_forward.12} parent=1 // pred_region
      %s187 = ssub.s32 128, 128
      %188 = vsyncadd [#allocation5], %s187
      %s189 = sshll.u32 [#allocation11], 4
      %s190 = int_to_ptr.vmem [resolvable:$true] %s189
      %195 = dma.vmem_to_hbm [thread:$0]  %s190, 128, %s4, [#allocation5], 64, 64, 4
    $region45: #{transformer_forward.12} parent=1 // pred_fallthru
      _
    // Predicated region
    $region46: #{transformer_forward.12} parent=1 // pred_check
      _
    $region47: #{transformer_forward.12} parent=1 // pred_check_branch
      %197 = sbr.rel (0) target = $region49
    $region48: #{transformer_forward.12} parent=1 // pred_region
      %198 = dma.done [#allocation5], 128
    $region49: #{transformer_forward.12} parent=1 // pred_fallthru
      _
    %199 = vsyncpa [#allocation4], 1
    %200 = vsyncpa [#allocation7], 1
    %201 = vsyncpa [#allocation10], 1
    %202 = vsyncpa [#allocation5], 1

// kernel: transformer_forward.14
$region0: #{transformer_forward.14}
  #allocation0 [shape = 'u32[]', space=smem, size = 0x4, offset = 0x4, fixed_abs, tag = 'smem constant byte address 0x4 - core index']
  #allocation1 [shape = 'u32[144,128]{1,0:T(1,128)}', space=vmem, size = 0x12000, scoped, tag = 'internal scratch']
  #allocation2 [shape = 'f32[16,32]{1,0:T(8,128)}', space=vmem, size = 0x2000, scoped, tag = 'scratch operand']
  %s0 = inlined_call_operand.hbm [shape: bf16[16,128], index: 0, kind: input, shape index: {}]
  %s1 = inlined_call_operand.hbm [shape: bf16[128,32], index: 1, kind: input, shape index: {}]
  %s2 = inlined_call_operand.hbm [shape: f32[1,32], index: 2, kind: input, shape index: {}]
  %s3 = inlined_call_operand.hbm [shape: bf16[16,32], index: 3, kind: input, shape index: {}]
  %s4 = inlined_call_operand.hbm [shape: bf16[16,32], index: 4, kind: output, shape index: {}]
  %s5 = sld [smem:[#allocation0]]
  $region50: #{transformer_forward.14} parent=0
    _
  %s7 = ssub.s32 1, %s5
  %s8 = scalar_select 0, %s7, %s5
  $region1: #{transformer_forward.14} parent=0
    #allocation3 [shape = 'u8[4096]{0}', space=vmem, size = 0x1000, scoped, tag = 'input window, operand 0, single buffered']
    #allocation4 [shape = 's32[1]{0}', space=sflag, size = 0x4, scoped, tag = 'scoped memory for transformer_forward.14']
    #allocation5 [shape = 's32[1]{0}', space=sflag, size = 0x4, scoped, tag = 'scoped memory for transformer_forward.14']
    #allocation6 [shape = 'u8[32768]{0}', space=vmem, size = 0x8000, scoped, tag = 'input window, operand 1, single buffered']
    #allocation7 [shape = 's32[1]{0}', space=sflag, size = 0x4, scoped, tag = 'scoped memory for transformer_forward.14']
    #allocation8 [shape = 'u8[512]{0}', space=vmem, size = 0x400, scoped, tag = 'input window, operand 2, single buffered']
    #allocation9 [shape = 'u8[4096]{0}', space=vmem, size = 0x1000, scoped, tag = 'input window, operand 3, single buffered']
    #allocation10 [shape = 's32[1]{0}', space=sflag, size = 0x4, scoped, tag = 'scoped memory for transformer_forward.14']
    #allocation11 [shape = 'u8[4096]{0}', space=vmem, size = 0x1000, scoped, tag = 'output window, operand 0, single buffered']
    %9 = vsyncpa [#allocation4], 0
    %10 = vsyncpa [#allocation7], 0
    %11 = vsyncpa [#allocation10], 0
    %12 = vsyncpa [#allocation5], 0
    // Predicated region
    $region2: #{transformer_forward.14} parent=1 // pred_check
      _
    $region3: #{transformer_forward.14} parent=1 // pred_check_branch
      %14 = sbr.rel (0) target = $region5
    $region4: #{transformer_forward.14} parent=1 // pred_region
      %s16 = ssub.s32 128, 128
      %17 = vsyncadd [#allocation4], %s16
      %s18 = sshll.u32 [#allocation3], 4
      %s19 = int_to_ptr.vmem [resolvable:$true] %s18
      %24 = dma.hbm_to_vmem [thread:$0]  %s0, 128, %s19, [#allocation4], 64, 64, 4
    $region5: #{transformer_forward.14} parent=1 // pred_fallthru
      _
    // Predicated region
    $region6: #{transformer_forward.14} parent=1 // pred_check
      _
    $region7: #{transformer_forward.14} parent=1 // pred_check_branch
      %26 = sbr.rel (0) target = $region9
    $region8: #{transformer_forward.14} parent=1 // pred_region
      %s28 = ssub.s32 1024, 1024
      %29 = vsyncadd [#allocation7], %s28
      %s30 = sshll.u32 [#allocation6], 4
      %s31 = int_to_ptr.vmem [resolvable:$true] %s30
      %36 = dma.hbm_to_vmem [thread:$0]  %s1, 1024, %s31, [#allocation7], 64, 64, 4
    $region9: #{transformer_forward.14} parent=1 // pred_fallthru
      _
    // Predicated region
    $region10: #{transformer_forward.14} parent=1 // pred_check
      _
    $region11: #{transformer_forward.14} parent=1 // pred_check_branch
      %38 = sbr.rel (0) target = $region13
    $region12: #{transformer_forward.14} parent=1 // pred_region
      %s40 = ssub.s32 16, 16
      %41 = vsyncadd [#allocation7], %s40
      %s43 = sshll.u32 [#allocation8], 4
      %s44 = int_to_ptr.vmem [resolvable:$true] %s43
      %46 = dma.hbm_to_vmem [thread:$0]  %s2, 16, %s44, [#allocation7]
    $region13: #{transformer_forward.14} parent=1 // pred_fallthru
      _
    // Predicated region
    $region14: #{transformer_forward.14} parent=1 // pred_check
      _
    $region15: #{transformer_forward.14} parent=1 // pred_check_branch
      %48 = sbr.rel (0) target = $region17
    $region16: #{transformer_forward.14} parent=1 // pred_region
      %s50 = ssub.s32 128, 128
      %51 = vsyncadd [#allocation10], %s50
      %s52 = sshll.u32 [#allocation9], 4
      %s53 = int_to_ptr.vmem [resolvable:$true] %s52
      %58 = dma.hbm_to_vmem [thread:$0]  %s3, 128, %s53, [#allocation10], 64, 64, 4
    $region17: #{transformer_forward.14} parent=1 // pred_fallthru
      _
    // Predicated region
    $region18: #{transformer_forward.14} parent=1 // pred_check
      _
    $region19: #{transformer_forward.14} parent=1 // pred_check_branch
      %60 = sbr.rel (0) target = $region21
    $region20: #{transformer_forward.14} parent=1 // pred_region
      %61 = dma.done [#allocation4], 128
    $region21: #{transformer_forward.14} parent=1 // pred_fallthru
      _
    // Predicated region
    $region22: #{transformer_forward.14} parent=1 // pred_check
      _
    $region23: #{transformer_forward.14} parent=1 // pred_check_branch
      %63 = sbr.rel (0) target = $region25
    $region24: #{transformer_forward.14} parent=1 // pred_region
      %64 = dma.done [#allocation7], 1024
    $region25: #{transformer_forward.14} parent=1 // pred_fallthru
      _
    // Predicated region
    $region26: #{transformer_forward.14} parent=1 // pred_check
      _
    $region27: #{transformer_forward.14} parent=1 // pred_check_branch
      %66 = sbr.rel (0) target = $region29
    $region28: #{transformer_forward.14} parent=1 // pred_region
      %67 = dma.done [#allocation7], 16
    $region29: #{transformer_forward.14} parent=1 // pred_fallthru
      _
    // Predicated region
    $region30: #{transformer_forward.14} parent=1 // pred_check
      _
    $region31: #{transformer_forward.14} parent=1 // pred_check_branch
      %69 = sbr.rel (0) target = $region33
    $region32: #{transformer_forward.14} parent=1 // pred_region
      %70 = dma.done [#allocation10], 128
    $region33: #{transformer_forward.14} parent=1 // pred_fallthru
      _
    %p72 = scmp.eq.s32.totalorder 0, 0
    // Predicated region
    $region34: #{transformer_forward.14} parent=1 // pred_check
      %p73 = pneg %p72
    $region35: #{transformer_forward.14} parent=1 // pred_check_branch
      %75 = sbr.rel (%p73) target = $region37
    $region36: #{transformer_forward.14} parent=1 // pred_region
      %vm76 = vcmask 261120
      %77 = vst.msk [vmem:[#allocation2] sm:$0xff] %vm76, 0.0
      %78 = vst.msk [vmem:[#allocation2 + $0x8] sm:$0xff] %vm76, 0.0
    $region37: #{transformer_forward.14} parent=1 // pred_fallthru
      _
    %v79 = vld [vmem:[#allocation2] sm:$0xff]
    %v80 = vld [vmem:[#allocation2 + $0x8] sm:$0xff]
    %v81 = vld [vmem:[#allocation3] sm:$0xf]
    %v82 = vld [vmem:[#allocation3 + $0x4] sm:$0xf]
    %v83 = vld [vmem:[#allocation6] sm:$0xf]
    %v84 = vld [vmem:[#allocation6 + $0x4] sm:$0xf]
    %v85 = vld [vmem:[#allocation6 + $0x8] sm:$0xf]
    %v86 = vld [vmem:[#allocation6 + $0xc] sm:$0xf]
    %v87 = vld [vmem:[#allocation6 + $0x10] sm:$0xf]
    %v88 = vld [vmem:[#allocation6 + $0x14] sm:$0xf]
    %v89 = vld [vmem:[#allocation6 + $0x18] sm:$0xf]
    %v90 = vld [vmem:[#allocation6 + $0x1c] sm:$0xf]
    %v91 = vld [vmem:[#allocation6 + $0x20] sm:$0xf]
    %v92 = vld [vmem:[#allocation6 + $0x24] sm:$0xf]
    %v93 = vld [vmem:[#allocation6 + $0x28] sm:$0xf]
    %v94 = vld [vmem:[#allocation6 + $0x2c] sm:$0xf]
    %v95 = vld [vmem:[#allocation6 + $0x30] sm:$0xf]
    %v96 = vld [vmem:[#allocation6 + $0x34] sm:$0xf]
    %v97 = vld [vmem:[#allocation6 + $0x38] sm:$0xf]
    %v98 = vld [vmem:[#allocation6 + $0x3c] sm:$0xf]
    %v101 = vunpack.c.l.b16 %v81
    %v102 = vunpack.c.l.b16 %v82
    %v103 = vpack.c.b16 %v102, %v101
    %v121 = vunpack.c.l.b16 %v83
    %v122 = vunpack.c.l.b16 %v84
    %v123 = vunpack.c.l.b16 %v85
    %v124 = vunpack.c.l.b16 %v86
    %v125 = vunpack.c.l.b16 %v87
    %v126 = vunpack.c.l.b16 %v88
    %v127 = vunpack.c.l.b16 %v89
    %v128 = vunpack.c.l.b16 %v90
    %v129 = vunpack.c.l.b16 %v91
    %v130 = vunpack.c.l.b16 %v92
    %v131 = vunpack.c.l.b16 %v93
    %v132 = vunpack.c.l.b16 %v94
    %v133 = vunpack.c.l.b16 %v95
    %v134 = vunpack.c.l.b16 %v96
    %v135 = vunpack.c.l.b16 %v97
    %v136 = vunpack.c.l.b16 %v98
    %v137 = vpack.c.b16 %v122, %v121
    %v138 = vpack.c.b16 %v124, %v123
    %v139 = vpack.c.b16 %v126, %v125
    %v140 = vpack.c.b16 %v128, %v127
    %v141 = vpack.c.b16 %v130, %v129
    %v142 = vpack.c.b16 %v132, %v131
    %v143 = vpack.c.b16 %v134, %v133
    %v144 = vpack.c.b16 %v136, %v135
    %153 = vmatprep.subr.bf16.mxu0 0
    %154 = vmatpush1.bf16.msra.mxu0 %v137
    %155 = vmatprep.subr.bf16.mxu0 0
    %156 = vmatpush1.bf16.msra.mxu0 %v138
    %157 = vmatprep.subr.bf16.mxu0 0
    %158 = vmatpush1.bf16.msra.mxu0 %v139
    %159 = vmatprep.subr.bf16.mxu0 0
    %160 = vmatpush1.bf16.msra.mxu0 %v140
    %161 = vmatprep.subr.bf16.mxu0 0
    %162 = vmatpush1.bf16.msra.mxu0 %v141
    %163 = vmatprep.subr.bf16.mxu0 0
    %164 = vmatpush1.bf16.msra.mxu0 %v142
    %165 = vmatprep.subr.bf16.mxu0 0
    %166 = vmatpush1.bf16.msra.mxu0 %v143
    %167 = vmatprep.subr.bf16.mxu0 0
    %168 = vmatpush1.bf16.msra.mxu0 %v144
    %169 = vmatprep.subr.bf16.mxu0 0
    %170 = vmatpush1.bf16.msra.mxu0 0
    %171 = vmatprep.subr.bf16.mxu0 0
    %172 = vmatpush1.bf16.msra.mxu0 0
    %173 = vmatprep.subr.bf16.mxu0 0
    %174 = vmatpush1.bf16.msra.mxu0 0
    %175 = vmatprep.subr.bf16.mxu0 0
    %176 = vmatpush1.bf16.msra.mxu0 0
    %177 = vmatprep.subr.bf16.mxu0 0
    %178 = vmatpush1.bf16.msra.mxu0 0
    %179 = vmatprep.subr.bf16.mxu0 0
    %180 = vmatpush1.bf16.msra.mxu0 0
    %181 = vmatprep.subr.bf16.mxu0 0
    %182 = vmatpush1.bf16.msra.mxu0 0
    %183 = vmatprep.subr.bf16.mxu0 0
    %184 = vmatpush1.bf16.msra.mxu0 0
    %185 = vmatprep.mubr.bf16.mxu0 0
    %186 = vmatmul.mubr.bf16.gmra.mrb[0].mxu0 %v103
    %v187 = vpop.f32.mrb[0].mxu0
    %v188 = vadd.f32 0.0, %v187
    %v189 = vpop.f32.mrb[0].mxu0
    %v190 = vpop.f32.mrb[0].mxu0
    %v191 = vadd.f32 0.0, %v190
    %v192 = vpop.f32.mrb[0].mxu0
    %193 = vdwg.mxu0
    %v194 = vadd.f32 %v79, %v188
    %v195 = vadd.f32 %v80, %v191
    %vm196 = vcmask 261120
    %197 = vst.msk [vmem:[#allocation2] sm:$0xff] %vm196, %v194
    %198 = vst.msk [vmem:[#allocation2 + $0x8] sm:$0xff] %vm196, %v195
    // Predicated region
    $region38: #{transformer_forward.14} parent=1 // pred_check
      %p199 = pneg %p72
    $region39: #{transformer_forward.14} parent=1 // pred_check_branch
      %201 = sbr.rel (%p199) target = $region41
    $region40: #{transformer_forward.14} parent=1 // pred_region
      %v202 = vld [vmem:[#allocation2] sm:$0xff]
      %v203 = vld [vmem:[#allocation2 + $0x8] sm:$0xff]
      %v204 = vld [vmem:[#allocation8] sm:$0x1]
      %v206 = vlaneseq
      %v207 = vshrl.u32 %v206, 7
      %v208 = vsub.s32 0, %v207
      %v209 = vrot.slane %v204, %v208
      %v211 = vadd.f32 %v202, %v209
      %v212 = vadd.f32 %v203, %v209
      %v213 = vld [vmem:[#allocation9] sm:$0xf]
      %v214 = vld [vmem:[#allocation9 + $0x4] sm:$0xf]
      %v215 = vunpack.c.l.bf16 %v213
      %v216 = vunpack.c.l.bf16 %v214
      %v217 = vadd.f32 %v211, %v215
      %v218 = vadd.f32 %v212, %v216
      %v219 = vpack.c.bf16 %v218, %v217
      %v221 = vunpack.c.l.b16 %v219
      %v222 = vunpack.c.h.b16 %v219
      %v223 = vpack.c.b16 %v221, %v221
      %v224 = vpack.c.b16 %v222, %v222
      %vm227 = vcmask 257024
      %228 = vst.msk [vmem:[#allocation11] sm:$0xf] %vm227, %v223
      %229 = vst.msk [vmem:[#allocation11 + $0x4] sm:$0xf] %vm227, %v224
    $region41: #{transformer_forward.14} parent=1 // pred_fallthru
      _
    // Predicated region
    $region42: #{transformer_forward.14} parent=1 // pred_check
      _
    $region43: #{transformer_forward.14} parent=1 // pred_check_branch
      %231 = sbr.rel (0) target = $region45
    $region44: #{transformer_forward.14} parent=1 // pred_region
      %s233 = ssub.s32 128, 128
      %234 = vsyncadd [#allocation5], %s233
      %s235 = sshll.u32 [#allocation11], 4
      %s236 = int_to_ptr.vmem [resolvable:$true] %s235
      %241 = dma.vmem_to_hbm [thread:$0]  %s236, 128, %s4, [#allocation5], 64, 64, 4
    $region45: #{transformer_forward.14} parent=1 // pred_fallthru
      _
    // Predicated region
    $region46: #{transformer_forward.14} parent=1 // pred_check
      _
    $region47: #{transformer_forward.14} parent=1 // pred_check_branch
      %243 = sbr.rel (0) target = $region49
    $region48: #{transformer_forward.14} parent=1 // pred_region
      %244 = dma.done [#allocation5], 128
    $region49: #{transformer_forward.14} parent=1 // pred_fallthru
      _
    %245 = vsyncpa [#allocation4], 1
    %246 = vsyncpa [#allocation7], 1
    %247 = vsyncpa [#allocation10], 1
    %248 = vsyncpa [#allocation5], 1

</llo_original>
